<compile_context>
chip_gen: v6e
topology: v6e:2x2x1
jax: 0.10.0
libtpu: 0.0.40
codegen_flags: <defaults>
</compile_context>

<pallas_src>
import functools

import jax
import jax.numpy as jnp
from jax.experimental import pallas as pl
from jax.experimental.pallas import tpu as pltpu


_LANE = 128      # vreg lane width
_SUBLANE = 8     # f32 sublane count


def _round_up(v: int, m: int) -> int:
    return ((v + m - 1) // m) * m


# ----------------------------------------------------------------------------
# Fused kernel: encoder MLP -> decoder MLP -> sigmoid -> per-(n,c) mean
# threshold.  One grid step = one tile of batch rows; weights stay resident.
# ----------------------------------------------------------------------------
def _fused_autoencoder_kernel(
    x_ref, ew1_ref, eb1_ref, ew2_ref, eb2_ref,
    dw1_ref, db1_ref, dw2_ref, db2_ref, o_ref, *, C, DHW, lane_dense_c,
):
    # Cast activations to bf16 right before each MXU matmul; accumulate in f32.
    # (Keep the x cast in-kernel: a wrapper-side cast would add a separate
    # HBM read+write pass.)
    x = x_ref[...].astype(jnp.bfloat16)

    h = jnp.dot(x, ew1_ref[...], preferred_element_type=jnp.float32)
    h = jnp.maximum(h + eb1_ref[...], 0.0)

    z = jnp.dot(h.astype(jnp.bfloat16), ew2_ref[...],
                preferred_element_type=jnp.float32)
    z = jnp.maximum(z + eb2_ref[...], 0.0)

    h2 = jnp.dot(z.astype(jnp.bfloat16), dw1_ref[...],
                 preferred_element_type=jnp.float32)
    h2 = jnp.maximum(h2 + db1_ref[...], 0.0)

    y = jnp.dot(h2.astype(jnp.bfloat16), dw2_ref[...],
                preferred_element_type=jnp.float32)
    y = jax.nn.sigmoid(y + db2_ref[...])          # f32 sigmoid (EUP path)

    # torch.mean(x, dim=(2,3,4), keepdim=True); torch.where(x >= thr, 1, 0).
    # Each output row is (C * D*H*W); the mean is per (n, c) chunk of DHW.
    # Padded batch rows (if any) are computed too but discarded by the caller;
    # every reduction here is strictly per-row, so valid rows are unaffected.
    if C == 1:
        thr = jnp.mean(y, axis=-1, keepdims=True)
        o_ref[...] = jnp.where(y >= thr, 1.0, 0.0).astype(o_ref.dtype)
    elif lane_dense_c:
        # Static per-channel loop over lane-aligned slices: avoids the
        # (m, C, DHW) reshape (sublane relayout) and keeps stores dense.
        for c in range(C):
            lo, hi = c * DHW, (c + 1) * DHW
            yc = y[:, lo:hi]
            thr = jnp.mean(yc, axis=-1, keepdims=True)
            o_ref[:, lo:hi] = jnp.where(yc >= thr, 1.0, 0.0).astype(o_ref.dtype)
    else:
        # Fallback (DHW not a multiple of 128): numerically identical, may
        # relayout.
        m_rows = y.shape[0]
        y3 = y.reshape(m_rows, C, DHW)
        thr = jnp.mean(y3, axis=-1, keepdims=True)
        o_ref[...] = jnp.where(y3 >= thr, 1.0, 0.0).reshape(
            m_rows, C * DHW).astype(o_ref.dtype)


# ----------------------------------------------------------------------------
# Wrapper
# ----------------------------------------------------------------------------
def autoencoder_forward(x, params, *, tile_m=128, out_dtype=jnp.float32):
    """x: (N, C, D, H, W) float32 -> binarized (0/1) volume of same shape.

    out_dtype: the binary output is exactly representable in bf16/int8; pass a
    narrower dtype if downstream allows to cut the largest HBM write.
    """
    N, C, D, H, W = x.shape
    DHW = D * H * W
    feat = C * DHW

    ew1, eb1 = params["enc_w1"], params["enc_b1"]
    ew2, eb2 = params["enc_w2"], params["enc_b2"]
    dw1, db1 = params["dec_w1"], params["dec_b1"]
    dw2, db2 = params["dec_w2"], params["dec_b2"]
    hidden = ew1.shape[1]
    latent_pad = ew2.shape[1]

    assert feat == ew1.shape[0] == dw2.shape[1]
    assert feat % _LANE == 0 and hidden % _LANE == 0 and latent_pad % _LANE == 0
    lane_dense_c = (DHW % _LANE == 0)

    # Batch tiling: pad rows to a full tile so every block / store is dense.
    tm = min(int(tile_m), _round_up(max(N, _SUBLANE), _SUBLANE))
    tm = _round_up(tm, _SUBLANE)
    m_pad = _round_up(max(N, tm), tm)
    grid_m = m_pad // tm

    x2d = x.reshape(N, feat).astype(jnp.float32)
    if m_pad != N:
        # Padded rows are wasted compute only; results are sliced off below.
        x2d = jnp.pad(x2d, ((0, m_pad - N), (0, 0)))

    # --- VMEM budget: x/out blocks double-buffered, weights single-buffered,
    # plus f32 intermediates; 2x headroom, floored at 8 MiB.
    weight_bytes = sum(int(p.size) * p.dtype.itemsize
                       for p in (ew1, eb1, ew2, eb2, dw1, db1, dw2, db2))
    io_block_bytes = tm * feat * 4
    interm_bytes = tm * (hidden + latent_pad + hidden + feat) * 4
    need = 2 * io_block_bytes + 2 * io_block_bytes + weight_bytes + interm_bytes
    vmem_limit = int(min(max(2 * need, 8 << 20), 100 << 20))

    flops = 2 * m_pad * (feat * hidden + hidden * latent_pad
                         + latent_pad * hidden + hidden * feat)
    bytes_accessed = (m_pad * feat * 4                       # x in
                      + m_pad * feat * jnp.dtype(out_dtype).itemsize  # out
                      + weight_bytes)

    def const_spec(shape):
        # Constant blocks (weights/biases): same block every grid step, so a
        # single VMEM buffer is enough — halves their resident footprint.
        return pl.BlockSpec(shape, lambda i: (0,) * len(shape),
                            pipeline_mode=pl.Buffered(1))

    out2d = pl.pallas_call(
        functools.partial(_fused_autoencoder_kernel,
                          C=C, DHW=DHW, lane_dense_c=lane_dense_c),
        out_shape=jax.ShapeDtypeStruct((m_pad, feat), out_dtype),
        grid=(grid_m,),
        in_specs=[
            pl.BlockSpec((tm, feat), lambda i: (i, 0)),          # x tile
            const_spec((feat, hidden)), const_spec((1, hidden)),
            const_spec((hidden, latent_pad)), const_spec((1, latent_pad)),
            const_spec((latent_pad, hidden)), const_spec((1, hidden)),
            const_spec((hidden, feat)), const_spec((1, feat)),
        ],
        out_specs=pl.BlockSpec((tm, feat), lambda i: (i, 0)),
        compiler_params=pltpu.CompilerParams(
            dimension_semantics=("parallel",),
            vmem_limit_bytes=vmem_limit),
        cost_estimate=pl.CostEstimate(
            flops=flops,
            transcendentals=m_pad * feat,
            bytes_accessed=bytes_accessed),
    )(x2d, ew1, eb1, ew2, eb2, dw1, db1, dw2, db2)

    if m_pad != N:
        # TODO(synk): this slice is an extra HBM round trip of the output; if
        # the caller can accept a padded batch, return out2d directly.
        out2d = out2d[:N]
    return out2d.reshape(N, C, D, H, W)


# ----------------------------------------------------------------------------
# Parameter construction (logical f32 params -> padded bf16 kernel params)
# ----------------------------------------------------------------------------
def init_params(key, feat, hidden, latent_dim, dtype=jnp.float32):
    ks = jax.random.split(key, 8)
    scale = 0.05
    return {
        "enc_w1": scale * jax.random.normal(ks[0], (feat, hidden), dtype),
        "enc_b1": scale * jax.random.normal(ks[1], (hidden,), dtype),
        "enc_w2": scale * jax.random.normal(ks[2], (hidden, latent_dim), dtype),
        "enc_b2": scale * jax.random.normal(ks[3], (latent_dim,), dtype),
        "dec_w1": scale * jax.random.normal(ks[4], (latent_dim, hidden), dtype),
        "dec_b1": scale * jax.random.normal(ks[5], (hidden,), dtype),
        "dec_w2": scale * jax.random.normal(ks[6], (hidden, feat), dtype),
        "dec_b2": scale * jax.random.normal(ks[7], (feat,), dtype),
    }


def prepare_params(p, latent_dim):
    """Pad the latent dim to a 128-lane multiple, cast weights to bf16.

    Zero-padded enc_w2 columns / enc_b2 entries produce relu(0)=0 latent units
    and zero-padded dec_w1 rows contribute nothing, so the valid outputs are
    numerically unchanged.  Biases stay f32, shaped (1, N) for broadcasting.
    """
    lp = _round_up(latent_dim, _LANE)
    pad = lp - latent_dim
    return {
        "enc_w1": p["enc_w1"].astype(jnp.bfloat16),
        "enc_b1": p["enc_b1"].reshape(1, -1).astype(jnp.float32),
        "enc_w2": jnp.pad(p["enc_w2"], ((0, 0), (0, pad))).astype(jnp.bfloat16),
        "enc_b2": jnp.pad(p["enc_b2"], ((0, pad),)).reshape(1, -1).astype(jnp.float32),
        "dec_w1": jnp.pad(p["dec_w1"], ((0, pad), (0, 0))).astype(jnp.bfloat16),
        "dec_b1": p["dec_b1"].reshape(1, -1).astype(jnp.float32),
        "dec_w2": p["dec_w2"].astype(jnp.bfloat16),
        "dec_b2": p["dec_b2"].reshape(1, -1).astype(jnp.float32),
    }


# ----------------------------------------------------------------------------
# Plain-JAX reference (same bf16-weight / f32-accumulate numerics)
# ----------------------------------------------------------------------------
def _reference_forward(x, params):
    N, C, D, H, W = x.shape
    feat = C * D * H * W

    def lin(a, w, b, act):
        o = jnp.dot(a.astype(jnp.bfloat16), w,
                    preferred_element_type=jnp.float32) + b
        return jnp.maximum(o, 0.0) if act == "relu" else jax.nn.sigmoid(o)

    a = x.reshape(N, feat)
    h = lin(a, params["enc_w1"], params["enc_b1"], "relu")
    z = lin(h, params["enc_w2"], params["enc_b2"], "relu")
    h2 = lin(z, params["dec_w1"], params["dec_b1"], "relu")
    y = lin(h2, params["dec_w2"], params["dec_b2"], "sigmoid")
    y = y.reshape(N, C, D * H * W)
    thr = jnp.mean(y, axis=-1, keepdims=True)
    return jnp.where(y >= thr, 1.0, 0.0).reshape(N, C, D, H, W)


if __name__ == "__main__":
    # Small deterministic example consistent with a 5-D (N, C, D, H, W) input;
    # C=2 exercises the lane-dense per-channel mean/threshold path.
    N, C, D, H, W = 2, 2, 8, 8, 8
    hidden = 128
    latent_dim = 100  # matches the PyTorch default

    key = jax.random.PRNGKey(0)
    k_x, k_p = jax.random.split(key)
    x = jax.random.normal(k_x, (N, C, D, H, W), jnp.float32)
    raw_params = init_params(k_p, C * D * H * W, hidden, latent_dim)
    params = prepare_params(raw_params, latent_dim)

    fwd = jax.jit(autoencoder_forward)
    out = jax.block_until_ready(fwd(x, params))

    assert out.shape == (N, C, D, H, W)
    assert out.dtype == jnp.float32
    # Output must be strictly binary (0.0 / 1.0).
    vals = jnp.unique(out)
    assert bool(jnp.all((vals == 0.0) | (vals == 1.0)))

    # Loose agreement check vs. a plain-JAX reference (only elements lying
    # exactly on the threshold boundary could legitimately differ).
    ref = _reference_forward(x, params)
    agree = float(jnp.mean((out == ref).astype(jnp.float32)))
    assert agree >= 0.98, f"kernel/reference agreement too low: {agree}"

    print("KERNEL_OK")
</pallas_src>

<mosaic_0001>
module attributes {stable_mosaic.version = 11 : i64} {
  func.func @_fused_autoencoder_kernel(%arg0: i32, %arg1: memref<8x1024xf32, #tpu.memory_space<vmem>>, %arg2: memref<1024x128xbf16, #tpu.memory_space<vmem>>, %arg3: memref<1x128xf32, #tpu.memory_space<vmem>>, %arg4: memref<128x128xbf16, #tpu.memory_space<vmem>>, %arg5: memref<1x128xf32, #tpu.memory_space<vmem>>, %arg6: memref<128x128xbf16, #tpu.memory_space<vmem>>, %arg7: memref<1x128xf32, #tpu.memory_space<vmem>>, %arg8: memref<128x1024xbf16, #tpu.memory_space<vmem>>, %arg9: memref<1x1024xf32, #tpu.memory_space<vmem>>, %arg10: memref<8x1024xf32, #tpu.memory_space<vmem>>) attributes {dimension_semantics = [#tpu.dimension_semantics<parallel>], iteration_bounds = array<i64: 1>, scalar_prefetch = 0 : i64, scratch_operands = 0 : i64, tpu.core_type = #tpu.core_type<tc>, window_params = [{transform_indices = @transform_0, window_bounds = array<i64: 8, 1024>}, {pipeline_mode = #tpu.pipeline_mode<synchronous>, transform_indices = @transform_1, window_bounds = array<i64: 1024, 128>}, {pipeline_mode = #tpu.pipeline_mode<synchronous>, transform_indices = @transform_2, window_bounds = array<i64: 1, 128>}, {pipeline_mode = #tpu.pipeline_mode<synchronous>, transform_indices = @transform_3, window_bounds = array<i64: 128, 128>}, {pipeline_mode = #tpu.pipeline_mode<synchronous>, transform_indices = @transform_4, window_bounds = array<i64: 1, 128>}, {pipeline_mode = #tpu.pipeline_mode<synchronous>, transform_indices = @transform_5, window_bounds = array<i64: 128, 128>}, {pipeline_mode = #tpu.pipeline_mode<synchronous>, transform_indices = @transform_6, window_bounds = array<i64: 1, 128>}, {pipeline_mode = #tpu.pipeline_mode<synchronous>, transform_indices = @transform_7, window_bounds = array<i64: 128, 1024>}, {pipeline_mode = #tpu.pipeline_mode<synchronous>, transform_indices = @transform_8, window_bounds = array<i64: 1, 1024>}, {transform_indices = @transform_9, window_bounds = array<i64: 8, 1024>}]} {
    %c0 = arith.constant 0 : index
    %c0_0 = arith.constant 0 : index
    %0 = vector.load %arg1[%c0, %c0_0] : memref<8x1024xf32, #tpu.memory_space<vmem>>, vector<8x1024xf32>
    %1 = arith.truncf %0 : vector<8x1024xf32> to vector<8x1024xbf16>
    %c0_1 = arith.constant 0 : index
    %c0_2 = arith.constant 0 : index
    %2 = vector.load %arg2[%c0_1, %c0_2] : memref<1024x128xbf16, #tpu.memory_space<vmem>>, vector<1024x128xbf16>
    %cst = arith.constant dense<0.000000e+00> : vector<8x128xf32>
    %3 = tpu.matmul %1, %2, %cst {dimension_numbers = #tpu.dot_dimension_numbers<[1], [0], [0], [1], [0, 0, 1, 1], [], []>} : vector<8x1024xbf16>, vector<1024x128xbf16>, vector<8x128xf32> -> vector<8x128xf32>
    %c0_3 = arith.constant 0 : index
    %c0_4 = arith.constant 0 : index
    %4 = vector.load %arg3[%c0_3, %c0_4] : memref<1x128xf32, #tpu.memory_space<vmem>>, vector<1x128xf32>
    %5 = vector.broadcast %4 : vector<1x128xf32> to vector<8x128xf32>
    %6 = arith.addf %3, %5 : vector<8x128xf32>
    %cst_5 = arith.constant 0.000000e+00 : f32
    %7 = vector.broadcast %cst_5 : f32 to vector<8x128xf32>
    %8 = arith.maximumf %6, %7 : vector<8x128xf32>
    %9 = arith.truncf %8 : vector<8x128xf32> to vector<8x128xbf16>
    %c0_6 = arith.constant 0 : index
    %c0_7 = arith.constant 0 : index
    %10 = vector.load %arg4[%c0_6, %c0_7] : memref<128x128xbf16, #tpu.memory_space<vmem>>, vector<128x128xbf16>
    %cst_8 = arith.constant dense<0.000000e+00> : vector<8x128xf32>
    %11 = tpu.matmul %9, %10, %cst_8 {dimension_numbers = #tpu.dot_dimension_numbers<[1], [0], [0], [1], [0, 0, 1, 1], [], []>} : vector<8x128xbf16>, vector<128x128xbf16>, vector<8x128xf32> -> vector<8x128xf32>
    %c0_9 = arith.constant 0 : index
    %c0_10 = arith.constant 0 : index
    %12 = vector.load %arg5[%c0_9, %c0_10] : memref<1x128xf32, #tpu.memory_space<vmem>>, vector<1x128xf32>
    %13 = vector.broadcast %12 : vector<1x128xf32> to vector<8x128xf32>
    %14 = arith.addf %11, %13 : vector<8x128xf32>
    %cst_11 = arith.constant 0.000000e+00 : f32
    %15 = vector.broadcast %cst_11 : f32 to vector<8x128xf32>
    %16 = arith.maximumf %14, %15 : vector<8x128xf32>
    %17 = arith.truncf %16 : vector<8x128xf32> to vector<8x128xbf16>
    %c0_12 = arith.constant 0 : index
    %c0_13 = arith.constant 0 : index
    %18 = vector.load %arg6[%c0_12, %c0_13] : memref<128x128xbf16, #tpu.memory_space<vmem>>, vector<128x128xbf16>
    %cst_14 = arith.constant dense<0.000000e+00> : vector<8x128xf32>
    %19 = tpu.matmul %17, %18, %cst_14 {dimension_numbers = #tpu.dot_dimension_numbers<[1], [0], [0], [1], [0, 0, 1, 1], [], []>} : vector<8x128xbf16>, vector<128x128xbf16>, vector<8x128xf32> -> vector<8x128xf32>
    %c0_15 = arith.constant 0 : index
    %c0_16 = arith.constant 0 : index
    %20 = vector.load %arg7[%c0_15, %c0_16] : memref<1x128xf32, #tpu.memory_space<vmem>>, vector<1x128xf32>
    %21 = vector.broadcast %20 : vector<1x128xf32> to vector<8x128xf32>
    %22 = arith.addf %19, %21 : vector<8x128xf32>
    %cst_17 = arith.constant 0.000000e+00 : f32
    %23 = vector.broadcast %cst_17 : f32 to vector<8x128xf32>
    %24 = arith.maximumf %22, %23 : vector<8x128xf32>
    %25 = arith.truncf %24 : vector<8x128xf32> to vector<8x128xbf16>
    %c0_18 = arith.constant 0 : index
    %c0_19 = arith.constant 0 : index
    %26 = vector.load %arg8[%c0_18, %c0_19] : memref<128x1024xbf16, #tpu.memory_space<vmem>>, vector<128x1024xbf16>
    %cst_20 = arith.constant dense<0.000000e+00> : vector<8x1024xf32>
    %27 = tpu.matmul %25, %26, %cst_20 {dimension_numbers = #tpu.dot_dimension_numbers<[1], [0], [0], [1], [0, 0, 1, 1], [], []>} : vector<8x128xbf16>, vector<128x1024xbf16>, vector<8x1024xf32> -> vector<8x1024xf32>
    %c0_21 = arith.constant 0 : index
    %c0_22 = arith.constant 0 : index
    %28 = vector.load %arg9[%c0_21, %c0_22] : memref<1x1024xf32, #tpu.memory_space<vmem>>, vector<1x1024xf32>
    %29 = vector.broadcast %28 : vector<1x1024xf32> to vector<8x1024xf32>
    %30 = arith.addf %27, %29 : vector<8x1024xf32>
    %31 = arith.negf %30 : vector<8x1024xf32>
    %32 = math.exp %31 : vector<8x1024xf32>
    %cst_23 = arith.constant 1.000000e+00 : f32
    %33 = vector.broadcast %cst_23 : f32 to vector<8x1024xf32>
    %34 = arith.addf %33, %32 : vector<8x1024xf32>
    %35 = arith.divf %33, %34 : vector<8x1024xf32>
    %36 = vector.extract_strided_slice %35 {offsets = [0, 0], sizes = [8, 512], strides = [1, 1]} : vector<8x1024xf32> to vector<8x512xf32>
    %cst_24 = arith.constant dense<0.000000e+00> : vector<8xf32>
    %37 = vector.multi_reduction <add>, %36, %cst_24 [1] : vector<8x512xf32> to vector<8xf32>
    %38 = vector.shape_cast %37 : vector<8xf32> to vector<8x1xf32>
    %cst_25 = arith.constant 5.120000e+02 : f32
    %39 = vector.broadcast %cst_25 : f32 to vector<8x1xf32>
    %40 = arith.divf %38, %39 : vector<8x1xf32>
    %41 = vector.broadcast %40 : vector<8x1xf32> to vector<8x512xf32>
    %42 = arith.cmpf oge, %36, %41 : vector<8x512xf32>
    %cst_26 = arith.constant 1.000000e+00 : f32
    %cst_27 = arith.constant 0.000000e+00 : f32
    %43 = vector.broadcast %cst_26 : f32 to vector<8x512xf32>
    %44 = vector.broadcast %cst_27 : f32 to vector<8x512xf32>
    %45 = arith.select %42, %43, %44 : vector<8x512xi1>, vector<8x512xf32>
    %c0_28 = arith.constant 0 : index
    %c0_29 = arith.constant 0 : index
    %46 = vector.load %arg10[%c0_28, %c0_29] : memref<8x1024xf32, #tpu.memory_space<vmem>>, vector<8x512xf32>
    tpu.vector_store %arg10[%c0_28, %c0_29], %45 {strides = array<i32>} : memref<8x1024xf32, #tpu.memory_space<vmem>>, vector<8x512xf32>,
    %47 = vector.extract_strided_slice %35 {offsets = [0, 512], sizes = [8, 512], strides = [1, 1]} : vector<8x1024xf32> to vector<8x512xf32>
    %cst_30 = arith.constant dense<0.000000e+00> : vector<8xf32>
    %48 = vector.multi_reduction <add>, %47, %cst_30 [1] : vector<8x512xf32> to vector<8xf32>
    %49 = vector.shape_cast %48 : vector<8xf32> to vector<8x1xf32>
    %cst_31 = arith.constant 5.120000e+02 : f32
    %50 = vector.broadcast %cst_31 : f32 to vector<8x1xf32>
    %51 = arith.divf %49, %50 : vector<8x1xf32>
    %52 = vector.broadcast %51 : vector<8x1xf32> to vector<8x512xf32>
    %53 = arith.cmpf oge, %47, %52 : vector<8x512xf32>
    %cst_32 = arith.constant 1.000000e+00 : f32
    %cst_33 = arith.constant 0.000000e+00 : f32
    %54 = vector.broadcast %cst_32 : f32 to vector<8x512xf32>
    %55 = vector.broadcast %cst_33 : f32 to vector<8x512xf32>
    %56 = arith.select %53, %54, %55 : vector<8x512xi1>, vector<8x512xf32>
    %c0_34 = arith.constant 0 : index
    %c512 = arith.constant 512 : index
    %57 = vector.load %arg10[%c0_34, %c512] : memref<8x1024xf32, #tpu.memory_space<vmem>>, vector<8x512xf32>
    tpu.vector_store %arg10[%c0_34, %c512], %56 {strides = array<i32>} : memref<8x1024xf32, #tpu.memory_space<vmem>>, vector<8x512xf32>,
    return
  }
  func.func @transform_0(%arg0: i32) -> (i32, i32) {
    %c0_i32 = arith.constant 0 : i32
    %c0_i32_0 = arith.constant 0 : i32
    return %arg0, %c0_i32 : i32, i32
  }
  func.func @transform_1(%arg0: i32) -> (i32, i32) {
    %c0_i32 = arith.constant 0 : i32
    %c0_i32_0 = arith.constant 0 : i32
    %c0_i32_1 = arith.constant 0 : i32
    return %c0_i32, %c0_i32_0 : i32, i32
  }
  func.func @transform_2(%arg0: i32) -> (i32, i32) {
    %c0_i32 = arith.constant 0 : i32
    %c0_i32_0 = arith.constant 0 : i32
    %c0_i32_1 = arith.constant 0 : i32
    return %c0_i32, %c0_i32_0 : i32, i32
  }
  func.func @transform_3(%arg0: i32) -> (i32, i32) {
    %c0_i32 = arith.constant 0 : i32
    %c0_i32_0 = arith.constant 0 : i32
    %c0_i32_1 = arith.constant 0 : i32
    return %c0_i32, %c0_i32_0 : i32, i32
  }
  func.func @transform_4(%arg0: i32) -> (i32, i32) {
    %c0_i32 = arith.constant 0 : i32
    %c0_i32_0 = arith.constant 0 : i32
    %c0_i32_1 = arith.constant 0 : i32
    return %c0_i32, %c0_i32_0 : i32, i32
  }
  func.func @transform_5(%arg0: i32) -> (i32, i32) {
    %c0_i32 = arith.constant 0 : i32
    %c0_i32_0 = arith.constant 0 : i32
    %c0_i32_1 = arith.constant 0 : i32
    return %c0_i32, %c0_i32_0 : i32, i32
  }
  func.func @transform_6(%arg0: i32) -> (i32, i32) {
    %c0_i32 = arith.constant 0 : i32
    %c0_i32_0 = arith.constant 0 : i32
    %c0_i32_1 = arith.constant 0 : i32
    return %c0_i32, %c0_i32_0 : i32, i32
  }
  func.func @transform_7(%arg0: i32) -> (i32, i32) {
    %c0_i32 = arith.constant 0 : i32
    %c0_i32_0 = arith.constant 0 : i32
    %c0_i32_1 = arith.constant 0 : i32
    return %c0_i32, %c0_i32_0 : i32, i32
  }
  func.func @transform_8(%arg0: i32) -> (i32, i32) {
    %c0_i32 = arith.constant 0 : i32
    %c0_i32_0 = arith.constant 0 : i32
    %c0_i32_1 = arith.constant 0 : i32
    return %c0_i32, %c0_i32_0 : i32, i32
  }
  func.func @transform_9(%arg0: i32) -> (i32, i32) {
    %c0_i32 = arith.constant 0 : i32
    %c0_i32_0 = arith.constant 0 : i32
    return %arg0, %c0_i32 : i32, i32
  }
}

</mosaic_0001>

<llo_original>
// kernel: autoencoder_forward.1
$region0: #{autoencoder_forward.1}
  #allocation0 [shape = 'u32[]', space=smem, size = 0x4, offset = 0x4, fixed_abs, tag = 'smem constant byte address 0x4 - core index']
  #allocation1 [shape = 'u32[144,128]{1,0:T(1,128)}', space=vmem, size = 0x12000, scoped, tag = 'internal scratch']
  %s0 = inlined_call_operand.vmem [shape: f32[8,1024], index: 0, kind: input, shape index: {}]
  %s1 = inlined_call_operand.hbm [shape: bf16[1024,128], index: 1, kind: input, shape index: {}]
  %s2 = inlined_call_operand.vmem [shape: f32[1,128], index: 2, kind: input, shape index: {}]
  %s3 = inlined_call_operand.vmem [shape: bf16[128,128], index: 3, kind: input, shape index: {}]
  %s4 = inlined_call_operand.vmem [shape: f32[1,128], index: 4, kind: input, shape index: {}]
  %s5 = inlined_call_operand.vmem [shape: bf16[128,128], index: 5, kind: input, shape index: {}]
  %s6 = inlined_call_operand.vmem [shape: f32[1,128], index: 6, kind: input, shape index: {}]
  %s7 = inlined_call_operand.hbm [shape: bf16[128,1024], index: 7, kind: input, shape index: {}]
  %s8 = inlined_call_operand.vmem [shape: f32[1,1024], index: 8, kind: input, shape index: {}]
  %s9 = inlined_call_operand.vmem [shape: f32[8,1024], index: 9, kind: output, shape index: {}]
  %s10 = sld [smem:[#allocation0]]
  $region54: #{autoencoder_forward.1} parent=0
    _
  %s12 = ssub.s32 1, %s10
  %s13 = scalar_select 0, %s12, %s10
  $region1: #{autoencoder_forward.1} parent=0
    #allocation2 [shape = 'u8[262144]{0}', space=vmem, size = 0x40000, scoped, tag = 'input window, operand 1, single buffered']
    #allocation3 [shape = 's32[1]{0}', space=sflag, size = 0x4, scoped, tag = 'scoped memory for autoencoder_forward.1']
    #allocation4 [shape = 'u8[262144]{0}', space=vmem, size = 0x40000, scoped, tag = 'input window, operand 7, single buffered']
    #allocation5 [shape = 's32[1]{0}', space=sflag, size = 0x4, scoped, tag = 'scoped memory for autoencoder_forward.1']
    %14 = vsyncpa [#allocation3], 0
    %15 = vsyncpa [#allocation5], 0
    // Predicated region
    $region2: #{autoencoder_forward.1} parent=1 // pred_check
      _
    $region3: #{autoencoder_forward.1} parent=1 // pred_check_branch
      %17 = sbr.rel (0) target = $region5
    $region4: #{autoencoder_forward.1} parent=1 // pred_region
      _
    $region5: #{autoencoder_forward.1} parent=1 // pred_fallthru
      _
    // Predicated region
    $region6: #{autoencoder_forward.1} parent=1 // pred_check
      _
    $region7: #{autoencoder_forward.1} parent=1 // pred_check_branch
      %19 = sbr.rel (0) target = $region9
    $region8: #{autoencoder_forward.1} parent=1 // pred_region
      %s21 = ssub.s32 8192, 8192
      %22 = vsyncadd [#allocation3], %s21
      %s23 = sshll.u32 [#allocation2], 4
      %s24 = int_to_ptr.vmem [resolvable:$true] %s23
      %29 = dma.hbm_to_vmem [thread:$0]  %s1, 8192, %s24, [#allocation3], 64, 64, 4
    $region9: #{autoencoder_forward.1} parent=1 // pred_fallthru
      _
    // Predicated region
    $region10: #{autoencoder_forward.1} parent=1 // pred_check
      _
    $region11: #{autoencoder_forward.1} parent=1 // pred_check_branch
      %31 = sbr.rel (0) target = $region13
    $region12: #{autoencoder_forward.1} parent=1 // pred_region
      _
    $region13: #{autoencoder_forward.1} parent=1 // pred_fallthru
      _
    // Predicated region
    $region14: #{autoencoder_forward.1} parent=1 // pred_check
      _
    $region15: #{autoencoder_forward.1} parent=1 // pred_check_branch
      %33 = sbr.rel (0) target = $region17
    $region16: #{autoencoder_forward.1} parent=1 // pred_region
      _
    $region17: #{autoencoder_forward.1} parent=1 // pred_fallthru
      _
    // Predicated region
    $region18: #{autoencoder_forward.1} parent=1 // pred_check
      _
    $region19: #{autoencoder_forward.1} parent=1 // pred_check_branch
      %35 = sbr.rel (0) target = $region21
    $region20: #{autoencoder_forward.1} parent=1 // pred_region
      _
    $region21: #{autoencoder_forward.1} parent=1 // pred_fallthru
      _
    // Predicated region
    $region22: #{autoencoder_forward.1} parent=1 // pred_check
      _
    $region23: #{autoencoder_forward.1} parent=1 // pred_check_branch
      %37 = sbr.rel (0) target = $region25
    $region24: #{autoencoder_forward.1} parent=1 // pred_region
      _
    $region25: #{autoencoder_forward.1} parent=1 // pred_fallthru
      _
    // Predicated region
    $region26: #{autoencoder_forward.1} parent=1 // pred_check
      _
    $region27: #{autoencoder_forward.1} parent=1 // pred_check_branch
      %39 = sbr.rel (0) target = $region29
    $region28: #{autoencoder_forward.1} parent=1 // pred_region
      _
    $region29: #{autoencoder_forward.1} parent=1 // pred_fallthru
      _
    // Predicated region
    $region30: #{autoencoder_forward.1} parent=1 // pred_check
      _
    $region31: #{autoencoder_forward.1} parent=1 // pred_check_branch
      %41 = sbr.rel (0) target = $region33
    $region32: #{autoencoder_forward.1} parent=1 // pred_region
      %s43 = ssub.s32 8192, 8192
      %44 = vsyncadd [#allocation5], %s43
      %s45 = sshll.u32 [#allocation4], 4
      %s46 = int_to_ptr.vmem [resolvable:$true] %s45
      %51 = dma.hbm_to_vmem [thread:$0]  %s7, 8192, %s46, [#allocation5], 512, 512, 32
    $region33: #{autoencoder_forward.1} parent=1 // pred_fallthru
      _
    // Predicated region
    $region34: #{autoencoder_forward.1} parent=1 // pred_check
      _
    $region35: #{autoencoder_forward.1} parent=1 // pred_check_branch
      %53 = sbr.rel (0) target = $region37
    $region36: #{autoencoder_forward.1} parent=1 // pred_region
      _
    $region37: #{autoencoder_forward.1} parent=1 // pred_fallthru
      _
    // Predicated region
    $region38: #{autoencoder_forward.1} parent=1 // pred_check
      _
    $region39: #{autoencoder_forward.1} parent=1 // pred_check_branch
      %55 = sbr.rel (0) target = $region41
    $region40: #{autoencoder_forward.1} parent=1 // pred_region
      %56 = dma.done [#allocation3], 8192
    $region41: #{autoencoder_forward.1} parent=1 // pred_fallthru
      _
    // Predicated region
    $region42: #{autoencoder_forward.1} parent=1 // pred_check
      _
    $region43: #{autoencoder_forward.1} parent=1 // pred_check_branch
      %58 = sbr.rel (0) target = $region45
    $region44: #{autoencoder_forward.1} parent=1 // pred_region
      %59 = dma.done [#allocation5], 8192
    $region45: #{autoencoder_forward.1} parent=1 // pred_fallthru
      _
    %v61 = vld [vmem:[%s0] sm:$0xff]
    %v62 = vld [vmem:[%s0 + $0x8] sm:$0xff]
    %v63 = vld [vmem:[%s0 + $0x10] sm:$0xff]
    %v64 = vld [vmem:[%s0 + $0x18] sm:$0xff]
    %v65 = vld [vmem:[%s0 + $0x20] sm:$0xff]
    %v66 = vld [vmem:[%s0 + $0x28] sm:$0xff]
    %v67 = vld [vmem:[%s0 + $0x30] sm:$0xff]
    %v68 = vld [vmem:[%s0 + $0x38] sm:$0xff]
    %v69 = vpack.c.bf16 %v61, %v61
    %v70 = vpack.c.bf16 %v62, %v62
    %v71 = vpack.c.bf16 %v63, %v63
    %v72 = vpack.c.bf16 %v64, %v64
    %v73 = vpack.c.bf16 %v65, %v65
    %v74 = vpack.c.bf16 %v66, %v66
    %v75 = vpack.c.bf16 %v67, %v67
    %v76 = vpack.c.bf16 %v68, %v68
    %v77 = vld [vmem:[#allocation2] sm:$0xf]
    %v78 = vld [vmem:[#allocation2 + $0x4] sm:$0xf]
    %v79 = vld [vmem:[#allocation2 + $0x8] sm:$0xf]
    %v80 = vld [vmem:[#allocation2 + $0xc] sm:$0xf]
    %v81 = vld [vmem:[#allocation2 + $0x10] sm:$0xf]
    %v82 = vld [vmem:[#allocation2 + $0x14] sm:$0xf]
    %v83 = vld [vmem:[#allocation2 + $0x18] sm:$0xf]
    %v84 = vld [vmem:[#allocation2 + $0x1c] sm:$0xf]
    %v85 = vld [vmem:[#allocation2 + $0x20] sm:$0xf]
    %v86 = vld [vmem:[#allocation2 + $0x24] sm:$0xf]
    %v87 = vld [vmem:[#allocation2 + $0x28] sm:$0xf]
    %v88 = vld [vmem:[#allocation2 + $0x2c] sm:$0xf]
    %v89 = vld [vmem:[#allocation2 + $0x30] sm:$0xf]
    %v90 = vld [vmem:[#allocation2 + $0x34] sm:$0xf]
    %v91 = vld [vmem:[#allocation2 + $0x38] sm:$0xf]
    %v92 = vld [vmem:[#allocation2 + $0x3c] sm:$0xf]
    %v93 = vld [vmem:[#allocation2 + $0x40] sm:$0xf]
    %v94 = vld [vmem:[#allocation2 + $0x44] sm:$0xf]
    %v95 = vld [vmem:[#allocation2 + $0x48] sm:$0xf]
    %v96 = vld [vmem:[#allocation2 + $0x4c] sm:$0xf]
    %v97 = vld [vmem:[#allocation2 + $0x50] sm:$0xf]
    %v98 = vld [vmem:[#allocation2 + $0x54] sm:$0xf]
    %v99 = vld [vmem:[#allocation2 + $0x58] sm:$0xf]
    %v100 = vld [vmem:[#allocation2 + $0x5c] sm:$0xf]
    %v101 = vld [vmem:[#allocation2 + $0x60] sm:$0xf]
    %v102 = vld [vmem:[#allocation2 + $0x64] sm:$0xf]
    %v103 = vld [vmem:[#allocation2 + $0x68] sm:$0xf]
    %v104 = vld [vmem:[#allocation2 + $0x6c] sm:$0xf]
    %v105 = vld [vmem:[#allocation2 + $0x70] sm:$0xf]
    %v106 = vld [vmem:[#allocation2 + $0x74] sm:$0xf]
    %v107 = vld [vmem:[#allocation2 + $0x78] sm:$0xf]
    %v108 = vld [vmem:[#allocation2 + $0x7c] sm:$0xf]
    %v109 = vld [vmem:[#allocation2 + $0x80] sm:$0xf]
    %v110 = vld [vmem:[#allocation2 + $0x84] sm:$0xf]
    %v111 = vld [vmem:[#allocation2 + $0x88] sm:$0xf]
    %v112 = vld [vmem:[#allocation2 + $0x8c] sm:$0xf]
    %v113 = vld [vmem:[#allocation2 + $0x90] sm:$0xf]
    %v114 = vld [vmem:[#allocation2 + $0x94] sm:$0xf]
    %v115 = vld [vmem:[#allocation2 + $0x98] sm:$0xf]
    %v116 = vld [vmem:[#allocation2 + $0x9c] sm:$0xf]
    %v117 = vld [vmem:[#allocation2 + $0xa0] sm:$0xf]
    %v118 = vld [vmem:[#allocation2 + $0xa4] sm:$0xf]
    %v119 = vld [vmem:[#allocation2 + $0xa8] sm:$0xf]
    %v120 = vld [vmem:[#allocation2 + $0xac] sm:$0xf]
    %v121 = vld [vmem:[#allocation2 + $0xb0] sm:$0xf]
    %v122 = vld [vmem:[#allocation2 + $0xb4] sm:$0xf]
    %v123 = vld [vmem:[#allocation2 + $0xb8] sm:$0xf]
    %v124 = vld [vmem:[#allocation2 + $0xbc] sm:$0xf]
    %v125 = vld [vmem:[#allocation2 + $0xc0] sm:$0xf]
    %v126 = vld [vmem:[#allocation2 + $0xc4] sm:$0xf]
    %v127 = vld [vmem:[#allocation2 + $0xc8] sm:$0xf]
    %v128 = vld [vmem:[#allocation2 + $0xcc] sm:$0xf]
    %v129 = vld [vmem:[#allocation2 + $0xd0] sm:$0xf]
    %v130 = vld [vmem:[#allocation2 + $0xd4] sm:$0xf]
    %v131 = vld [vmem:[#allocation2 + $0xd8] sm:$0xf]
    %v132 = vld [vmem:[#allocation2 + $0xdc] sm:$0xf]
    %v133 = vld [vmem:[#allocation2 + $0xe0] sm:$0xf]
    %v134 = vld [vmem:[#allocation2 + $0xe4] sm:$0xf]
    %v135 = vld [vmem:[#allocation2 + $0xe8] sm:$0xf]
    %v136 = vld [vmem:[#allocation2 + $0xec] sm:$0xf]
    %v137 = vld [vmem:[#allocation2 + $0xf0] sm:$0xf]
    %v138 = vld [vmem:[#allocation2 + $0xf4] sm:$0xf]
    %v139 = vld [vmem:[#allocation2 + $0xf8] sm:$0xf]
    %v140 = vld [vmem:[#allocation2 + $0xfc] sm:$0xf]
    %v141 = vld [vmem:[#allocation2 + $0x100] sm:$0xf]
    %v142 = vld [vmem:[#allocation2 + $0x104] sm:$0xf]
    %v143 = vld [vmem:[#allocation2 + $0x108] sm:$0xf]
    %v144 = vld [vmem:[#allocation2 + $0x10c] sm:$0xf]
    %v145 = vld [vmem:[#allocation2 + $0x110] sm:$0xf]
    %v146 = vld [vmem:[#allocation2 + $0x114] sm:$0xf]
    %v147 = vld [vmem:[#allocation2 + $0x118] sm:$0xf]
    %v148 = vld [vmem:[#allocation2 + $0x11c] sm:$0xf]
    %v149 = vld [vmem:[#allocation2 + $0x120] sm:$0xf]
    %v150 = vld [vmem:[#allocation2 + $0x124] sm:$0xf]
    %v151 = vld [vmem:[#allocation2 + $0x128] sm:$0xf]
    %v152 = vld [vmem:[#allocation2 + $0x12c] sm:$0xf]
    %v153 = vld [vmem:[#allocation2 + $0x130] sm:$0xf]
    %v154 = vld [vmem:[#allocation2 + $0x134] sm:$0xf]
    %v155 = vld [vmem:[#allocation2 + $0x138] sm:$0xf]
    %v156 = vld [vmem:[#allocation2 + $0x13c] sm:$0xf]
    %v157 = vld [vmem:[#allocation2 + $0x140] sm:$0xf]
    %v158 = vld [vmem:[#allocation2 + $0x144] sm:$0xf]
    %v159 = vld [vmem:[#allocation2 + $0x148] sm:$0xf]
    %v160 = vld [vmem:[#allocation2 + $0x14c] sm:$0xf]
    %v161 = vld [vmem:[#allocation2 + $0x150] sm:$0xf]
    %v162 = vld [vmem:[#allocation2 + $0x154] sm:$0xf]
    %v163 = vld [vmem:[#allocation2 + $0x158] sm:$0xf]
    %v164 = vld [vmem:[#allocation2 + $0x15c] sm:$0xf]
    %v165 = vld [vmem:[#allocation2 + $0x160] sm:$0xf]
    %v166 = vld [vmem:[#allocation2 + $0x164] sm:$0xf]
    %v167 = vld [vmem:[#allocation2 + $0x168] sm:$0xf]
    %v168 = vld [vmem:[#allocation2 + $0x16c] sm:$0xf]
    %v169 = vld [vmem:[#allocation2 + $0x170] sm:$0xf]
    %v170 = vld [vmem:[#allocation2 + $0x174] sm:$0xf]
    %v171 = vld [vmem:[#allocation2 + $0x178] sm:$0xf]
    %v172 = vld [vmem:[#allocation2 + $0x17c] sm:$0xf]
    %v173 = vld [vmem:[#allocation2 + $0x180] sm:$0xf]
    %v174 = vld [vmem:[#allocation2 + $0x184] sm:$0xf]
    %v175 = vld [vmem:[#allocation2 + $0x188] sm:$0xf]
    %v176 = vld [vmem:[#allocation2 + $0x18c] sm:$0xf]
    %v177 = vld [vmem:[#allocation2 + $0x190] sm:$0xf]
    %v178 = vld [vmem:[#allocation2 + $0x194] sm:$0xf]
    %v179 = vld [vmem:[#allocation2 + $0x198] sm:$0xf]
    %v180 = vld [vmem:[#allocation2 + $0x19c] sm:$0xf]
    %v181 = vld [vmem:[#allocation2 + $0x1a0] sm:$0xf]
    %v182 = vld [vmem:[#allocation2 + $0x1a4] sm:$0xf]
    %v183 = vld [vmem:[#allocation2 + $0x1a8] sm:$0xf]
    %v184 = vld [vmem:[#allocation2 + $0x1ac] sm:$0xf]
    %v185 = vld [vmem:[#allocation2 + $0x1b0] sm:$0xf]
    %v186 = vld [vmem:[#allocation2 + $0x1b4] sm:$0xf]
    %v187 = vld [vmem:[#allocation2 + $0x1b8] sm:$0xf]
    %v188 = vld [vmem:[#allocation2 + $0x1bc] sm:$0xf]
    %v189 = vld [vmem:[#allocation2 + $0x1c0] sm:$0xf]
    %v190 = vld [vmem:[#allocation2 + $0x1c4] sm:$0xf]
    %v191 = vld [vmem:[#allocation2 + $0x1c8] sm:$0xf]
    %v192 = vld [vmem:[#allocation2 + $0x1cc] sm:$0xf]
    %v193 = vld [vmem:[#allocation2 + $0x1d0] sm:$0xf]
    %v194 = vld [vmem:[#allocation2 + $0x1d4] sm:$0xf]
    %v195 = vld [vmem:[#allocation2 + $0x1d8] sm:$0xf]
    %v196 = vld [vmem:[#allocation2 + $0x1dc] sm:$0xf]
    %v197 = vld [vmem:[#allocation2 + $0x1e0] sm:$0xf]
    %v198 = vld [vmem:[#allocation2 + $0x1e4] sm:$0xf]
    %v199 = vld [vmem:[#allocation2 + $0x1e8] sm:$0xf]
    %v200 = vld [vmem:[#allocation2 + $0x1ec] sm:$0xf]
    %v201 = vld [vmem:[#allocation2 + $0x1f0] sm:$0xf]
    %v202 = vld [vmem:[#allocation2 + $0x1f4] sm:$0xf]
    %v203 = vld [vmem:[#allocation2 + $0x1f8] sm:$0xf]
    %v204 = vld [vmem:[#allocation2 + $0x1fc] sm:$0xf]
    %v205 = vld [vmem:[%s2] sm:$0x1]
    %v207 = vlaneseq
    %v208 = vshrl.u32 %v207, 7
    %v209 = vsub.s32 0, %v208
    %v210 = vrot.slane %v205, %v209
    %v340 = vunpack.c.l.b16 %v77
    %v341 = vunpack.c.l.b16 %v78
    %v342 = vunpack.c.l.b16 %v79
    %v343 = vunpack.c.l.b16 %v80
    %v344 = vunpack.c.l.b16 %v81
    %v345 = vunpack.c.l.b16 %v82
    %v346 = vunpack.c.l.b16 %v83
    %v347 = vunpack.c.l.b16 %v84
    %v348 = vunpack.c.l.b16 %v85
    %v349 = vunpack.c.l.b16 %v86
    %v350 = vunpack.c.l.b16 %v87
    %v351 = vunpack.c.l.b16 %v88
    %v352 = vunpack.c.l.b16 %v89
    %v353 = vunpack.c.l.b16 %v90
    %v354 = vunpack.c.l.b16 %v91
    %v355 = vunpack.c.l.b16 %v92
    %v356 = vunpack.c.l.b16 %v93
    %v357 = vunpack.c.l.b16 %v94
    %v358 = vunpack.c.l.b16 %v95
    %v359 = vunpack.c.l.b16 %v96
    %v360 = vunpack.c.l.b16 %v97
    %v361 = vunpack.c.l.b16 %v98
    %v362 = vunpack.c.l.b16 %v99
    %v363 = vunpack.c.l.b16 %v100
    %v364 = vunpack.c.l.b16 %v101
    %v365 = vunpack.c.l.b16 %v102
    %v366 = vunpack.c.l.b16 %v103
    %v367 = vunpack.c.l.b16 %v104
    %v368 = vunpack.c.l.b16 %v105
    %v369 = vunpack.c.l.b16 %v106
    %v370 = vunpack.c.l.b16 %v107
    %v371 = vunpack.c.l.b16 %v108
    %v372 = vunpack.c.l.b16 %v109
    %v373 = vunpack.c.l.b16 %v110
    %v374 = vunpack.c.l.b16 %v111
    %v375 = vunpack.c.l.b16 %v112
    %v376 = vunpack.c.l.b16 %v113
    %v377 = vunpack.c.l.b16 %v114
    %v378 = vunpack.c.l.b16 %v115
    %v379 = vunpack.c.l.b16 %v116
    %v380 = vunpack.c.l.b16 %v117
    %v381 = vunpack.c.l.b16 %v118
    %v382 = vunpack.c.l.b16 %v119
    %v383 = vunpack.c.l.b16 %v120
    %v384 = vunpack.c.l.b16 %v121
    %v385 = vunpack.c.l.b16 %v122
    %v386 = vunpack.c.l.b16 %v123
    %v387 = vunpack.c.l.b16 %v124
    %v388 = vunpack.c.l.b16 %v125
    %v389 = vunpack.c.l.b16 %v126
    %v390 = vunpack.c.l.b16 %v127
    %v391 = vunpack.c.l.b16 %v128
    %v392 = vunpack.c.l.b16 %v129
    %v393 = vunpack.c.l.b16 %v130
    %v394 = vunpack.c.l.b16 %v131
    %v395 = vunpack.c.l.b16 %v132
    %v396 = vunpack.c.l.b16 %v133
    %v397 = vunpack.c.l.b16 %v134
    %v398 = vunpack.c.l.b16 %v135
    %v399 = vunpack.c.l.b16 %v136
    %v400 = vunpack.c.l.b16 %v137
    %v401 = vunpack.c.l.b16 %v138
    %v402 = vunpack.c.l.b16 %v139
    %v403 = vunpack.c.l.b16 %v140
    %v404 = vunpack.c.l.b16 %v141
    %v405 = vunpack.c.l.b16 %v142
    %v406 = vunpack.c.l.b16 %v143
    %v407 = vunpack.c.l.b16 %v144
    %v408 = vunpack.c.l.b16 %v145
    %v409 = vunpack.c.l.b16 %v146
    %v410 = vunpack.c.l.b16 %v147
    %v411 = vunpack.c.l.b16 %v148
    %v412 = vunpack.c.l.b16 %v149
    %v413 = vunpack.c.l.b16 %v150
    %v414 = vunpack.c.l.b16 %v151
    %v415 = vunpack.c.l.b16 %v152
    %v416 = vunpack.c.l.b16 %v153
    %v417 = vunpack.c.l.b16 %v154
    %v418 = vunpack.c.l.b16 %v155
    %v419 = vunpack.c.l.b16 %v156
    %v420 = vunpack.c.l.b16 %v157
    %v421 = vunpack.c.l.b16 %v158
    %v422 = vunpack.c.l.b16 %v159
    %v423 = vunpack.c.l.b16 %v160
    %v424 = vunpack.c.l.b16 %v161
    %v425 = vunpack.c.l.b16 %v162
    %v426 = vunpack.c.l.b16 %v163
    %v427 = vunpack.c.l.b16 %v164
    %v428 = vunpack.c.l.b16 %v165
    %v429 = vunpack.c.l.b16 %v166
    %v430 = vunpack.c.l.b16 %v167
    %v431 = vunpack.c.l.b16 %v168
    %v432 = vunpack.c.l.b16 %v169
    %v433 = vunpack.c.l.b16 %v170
    %v434 = vunpack.c.l.b16 %v171
    %v435 = vunpack.c.l.b16 %v172
    %v436 = vunpack.c.l.b16 %v173
    %v437 = vunpack.c.l.b16 %v174
    %v438 = vunpack.c.l.b16 %v175
    %v439 = vunpack.c.l.b16 %v176
    %v440 = vunpack.c.l.b16 %v177
    %v441 = vunpack.c.l.b16 %v178
    %v442 = vunpack.c.l.b16 %v179
    %v443 = vunpack.c.l.b16 %v180
    %v444 = vunpack.c.l.b16 %v181
    %v445 = vunpack.c.l.b16 %v182
    %v446 = vunpack.c.l.b16 %v183
    %v447 = vunpack.c.l.b16 %v184
    %v448 = vunpack.c.l.b16 %v185
    %v449 = vunpack.c.l.b16 %v186
    %v450 = vunpack.c.l.b16 %v187
    %v451 = vunpack.c.l.b16 %v188
    %v452 = vunpack.c.l.b16 %v189
    %v453 = vunpack.c.l.b16 %v190
    %v454 = vunpack.c.l.b16 %v191
    %v455 = vunpack.c.l.b16 %v192
    %v456 = vunpack.c.l.b16 %v193
    %v457 = vunpack.c.l.b16 %v194
    %v458 = vunpack.c.l.b16 %v195
    %v459 = vunpack.c.l.b16 %v196
    %v460 = vunpack.c.l.b16 %v197
    %v461 = vunpack.c.l.b16 %v198
    %v462 = vunpack.c.l.b16 %v199
    %v463 = vunpack.c.l.b16 %v200
    %v464 = vunpack.c.l.b16 %v201
    %v465 = vunpack.c.l.b16 %v202
    %v466 = vunpack.c.l.b16 %v203
    %v467 = vunpack.c.l.b16 %v204
    %v468 = vpack.c.b16 %v341, %v340
    %v469 = vpack.c.b16 %v343, %v342
    %v470 = vpack.c.b16 %v345, %v344
    %v471 = vpack.c.b16 %v347, %v346
    %v472 = vpack.c.b16 %v349, %v348
    %v473 = vpack.c.b16 %v351, %v350
    %v474 = vpack.c.b16 %v353, %v352
    %v475 = vpack.c.b16 %v355, %v354
    %v476 = vpack.c.b16 %v357, %v356
    %v477 = vpack.c.b16 %v359, %v358
    %v478 = vpack.c.b16 %v361, %v360
    %v479 = vpack.c.b16 %v363, %v362
    %v480 = vpack.c.b16 %v365, %v364
    %v481 = vpack.c.b16 %v367, %v366
    %v482 = vpack.c.b16 %v369, %v368
    %v483 = vpack.c.b16 %v371, %v370
    %v484 = vpack.c.b16 %v373, %v372
    %v485 = vpack.c.b16 %v375, %v374
    %v486 = vpack.c.b16 %v377, %v376
    %v487 = vpack.c.b16 %v379, %v378
    %v488 = vpack.c.b16 %v381, %v380
    %v489 = vpack.c.b16 %v383, %v382
    %v490 = vpack.c.b16 %v385, %v384
    %v491 = vpack.c.b16 %v387, %v386
    %v492 = vpack.c.b16 %v389, %v388
    %v493 = vpack.c.b16 %v391, %v390
    %v494 = vpack.c.b16 %v393, %v392
    %v495 = vpack.c.b16 %v395, %v394
    %v496 = vpack.c.b16 %v397, %v396
    %v497 = vpack.c.b16 %v399, %v398
    %v498 = vpack.c.b16 %v401, %v400
    %v499 = vpack.c.b16 %v403, %v402
    %v500 = vpack.c.b16 %v405, %v404
    %v501 = vpack.c.b16 %v407, %v406
    %v502 = vpack.c.b16 %v409, %v408
    %v503 = vpack.c.b16 %v411, %v410
    %v504 = vpack.c.b16 %v413, %v412
    %v505 = vpack.c.b16 %v415, %v414
    %v506 = vpack.c.b16 %v417, %v416
    %v507 = vpack.c.b16 %v419, %v418
    %v508 = vpack.c.b16 %v421, %v420
    %v509 = vpack.c.b16 %v423, %v422
    %v510 = vpack.c.b16 %v425, %v424
    %v511 = vpack.c.b16 %v427, %v426
    %v512 = vpack.c.b16 %v429, %v428
    %v513 = vpack.c.b16 %v431, %v430
    %v514 = vpack.c.b16 %v433, %v432
    %v515 = vpack.c.b16 %v435, %v434
    %v516 = vpack.c.b16 %v437, %v436
    %v517 = vpack.c.b16 %v439, %v438
    %v518 = vpack.c.b16 %v441, %v440
    %v519 = vpack.c.b16 %v443, %v442
    %v520 = vpack.c.b16 %v445, %v444
    %v521 = vpack.c.b16 %v447, %v446
    %v522 = vpack.c.b16 %v449, %v448
    %v523 = vpack.c.b16 %v451, %v450
    %v524 = vpack.c.b16 %v453, %v452
    %v525 = vpack.c.b16 %v455, %v454
    %v526 = vpack.c.b16 %v457, %v456
    %v527 = vpack.c.b16 %v459, %v458
    %v528 = vpack.c.b16 %v461, %v460
    %v529 = vpack.c.b16 %v463, %v462
    %v530 = vpack.c.b16 %v465, %v464
    %v531 = vpack.c.b16 %v467, %v466
    %596 = vmatprep.subr.bf16.mxu0 0
    %597 = vmatpush1.bf16.msra.mxu0 %v475
    %598 = vmatprep.subr.bf16.mxu0 0
    %599 = vmatpush1.bf16.msra.mxu0 %v474
    %600 = vmatprep.subr.bf16.mxu0 0
    %601 = vmatpush1.bf16.msra.mxu0 %v473
    %602 = vmatprep.subr.bf16.mxu0 0
    %603 = vmatpush1.bf16.msra.mxu0 %v472
    %604 = vmatprep.subr.bf16.mxu0 0
    %605 = vmatpush1.bf16.msra.mxu0 %v471
    %606 = vmatprep.subr.bf16.mxu0 0
    %607 = vmatpush1.bf16.msra.mxu0 %v470
    %608 = vmatprep.subr.bf16.mxu0 0
    %609 = vmatpush1.bf16.msra.mxu0 %v469
    %610 = vmatprep.subr.bf16.mxu0 0
    %611 = vmatpush1.bf16.msra.mxu0 %v468
    %612 = vmatprep.subr.bf16.mxu0 0
    %613 = vmatpush2.bf16.msra.mxu0 %v483
    %614 = vmatprep.subr.bf16.mxu0 0
    %615 = vmatpush2.bf16.msra.mxu0 %v482
    %616 = vmatprep.subr.bf16.mxu0 0
    %617 = vmatpush2.bf16.msra.mxu0 %v481
    %618 = vmatprep.subr.bf16.mxu0 0
    %619 = vmatpush2.bf16.msra.mxu0 %v480
    %620 = vmatprep.subr.bf16.mxu0 0
    %621 = vmatpush2.bf16.msra.mxu0 %v479
    %622 = vmatprep.subr.bf16.mxu0 0
    %623 = vmatpush2.bf16.msra.mxu0 %v478
    %624 = vmatprep.subr.bf16.mxu0 0
    %625 = vmatpush2.bf16.msra.mxu0 %v477
    %626 = vmatprep.subr.bf16.mxu0 0
    %627 = vmatpush2.bf16.msra.mxu0 %v476
    %628 = vmatprep.mubr.bf16.mxu0 %v70
    %629 = vmatmul.mubr.bf16.gmra.mxu0 %v69
    %v630 = vpop.f32.mrf.mxu0
    %v631 = vadd.f32 %v210, %v630
    %v632 = vpop.f32.mrf.mxu0
    %v633 = vpop.f32.mrf.mxu0
    %v634 = vpop.f32.mrf.mxu0
    %635 = vdwg.mxu0
    %636 = vmatprep.subr.bf16.mxu0 0
    %637 = vmatpush1.bf16.msra.mxu0 %v491
    %638 = vmatprep.subr.bf16.mxu0 0
    %639 = vmatpush1.bf16.msra.mxu0 %v490
    %640 = vmatprep.subr.bf16.mxu0 0
    %641 = vmatpush1.bf16.msra.mxu0 %v489
    %642 = vmatprep.subr.bf16.mxu0 0
    %643 = vmatpush1.bf16.msra.mxu0 %v488
    %644 = vmatprep.subr.bf16.mxu0 0
    %645 = vmatpush1.bf16.msra.mxu0 %v487
    %646 = vmatprep.subr.bf16.mxu0 0
    %647 = vmatpush1.bf16.msra.mxu0 %v486
    %648 = vmatprep.subr.bf16.mxu0 0
    %649 = vmatpush1.bf16.msra.mxu0 %v485
    %650 = vmatprep.subr.bf16.mxu0 0
    %651 = vmatpush1.bf16.msra.mxu0 %v484
    %652 = vmatprep.subr.bf16.mxu0 0
    %653 = vmatpush2.bf16.msra.mxu0 %v499
    %654 = vmatprep.subr.bf16.mxu0 0
    %655 = vmatpush2.bf16.msra.mxu0 %v498
    %656 = vmatprep.subr.bf16.mxu0 0
    %657 = vmatpush2.bf16.msra.mxu0 %v497
    %658 = vmatprep.subr.bf16.mxu0 0
    %659 = vmatpush2.bf16.msra.mxu0 %v496
    %660 = vmatprep.subr.bf16.mxu0 0
    %661 = vmatpush2.bf16.msra.mxu0 %v495
    %662 = vmatprep.subr.bf16.mxu0 0
    %663 = vmatpush2.bf16.msra.mxu0 %v494
    %664 = vmatprep.subr.bf16.mxu0 0
    %665 = vmatpush2.bf16.msra.mxu0 %v493
    %666 = vmatprep.subr.bf16.mxu0 0
    %667 = vmatpush2.bf16.msra.mxu0 %v492
    %668 = vmatprep.mubr.bf16.mxu0 %v72
    %669 = vmatmul.mubr.bf16.gmra.mxu0 %v71
    %v670 = vpop.f32.mrf.mxu0
    %v671 = vadd.f32 %v631, %v670
    %v672 = vpop.f32.mrf.mxu0
    %v673 = vpop.f32.mrf.mxu0
    %v674 = vpop.f32.mrf.mxu0
    %675 = vdwg.mxu0
    %676 = vmatprep.subr.bf16.mxu0 0
    %677 = vmatpush1.bf16.msra.mxu0 %v507
    %678 = vmatprep.subr.bf16.mxu0 0
    %679 = vmatpush1.bf16.msra.mxu0 %v506
    %680 = vmatprep.subr.bf16.mxu0 0
    %681 = vmatpush1.bf16.msra.mxu0 %v505
    %682 = vmatprep.subr.bf16.mxu0 0
    %683 = vmatpush1.bf16.msra.mxu0 %v504
    %684 = vmatprep.subr.bf16.mxu0 0
    %685 = vmatpush1.bf16.msra.mxu0 %v503
    %686 = vmatprep.subr.bf16.mxu0 0
    %687 = vmatpush1.bf16.msra.mxu0 %v502
    %688 = vmatprep.subr.bf16.mxu0 0
    %689 = vmatpush1.bf16.msra.mxu0 %v501
    %690 = vmatprep.subr.bf16.mxu0 0
    %691 = vmatpush1.bf16.msra.mxu0 %v500
    %692 = vmatprep.subr.bf16.mxu0 0
    %693 = vmatpush2.bf16.msra.mxu0 %v515
    %694 = vmatprep.subr.bf16.mxu0 0
    %695 = vmatpush2.bf16.msra.mxu0 %v514
    %696 = vmatprep.subr.bf16.mxu0 0
    %697 = vmatpush2.bf16.msra.mxu0 %v513
    %698 = vmatprep.subr.bf16.mxu0 0
    %699 = vmatpush2.bf16.msra.mxu0 %v512
    %700 = vmatprep.subr.bf16.mxu0 0
    %701 = vmatpush2.bf16.msra.mxu0 %v511
    %702 = vmatprep.subr.bf16.mxu0 0
    %703 = vmatpush2.bf16.msra.mxu0 %v510
    %704 = vmatprep.subr.bf16.mxu0 0
    %705 = vmatpush2.bf16.msra.mxu0 %v509
    %706 = vmatprep.subr.bf16.mxu0 0
    %707 = vmatpush2.bf16.msra.mxu0 %v508
    %708 = vmatprep.mubr.bf16.mxu0 %v74
    %709 = vmatmul.mubr.bf16.gmra.mxu0 %v73
    %v710 = vpop.f32.mrf.mxu0
    %v711 = vadd.f32 %v671, %v710
    %v712 = vpop.f32.mrf.mxu0
    %v713 = vpop.f32.mrf.mxu0
    %v714 = vpop.f32.mrf.mxu0
    %715 = vdwg.mxu0
    %716 = vmatprep.subr.bf16.mxu0 0
    %717 = vmatpush1.bf16.msra.mxu0 %v523
    %718 = vmatprep.subr.bf16.mxu0 0
    %719 = vmatpush1.bf16.msra.mxu0 %v522
    %720 = vmatprep.subr.bf16.mxu0 0
    %721 = vmatpush1.bf16.msra.mxu0 %v521
    %722 = vmatprep.subr.bf16.mxu0 0
    %723 = vmatpush1.bf16.msra.mxu0 %v520
    %724 = vmatprep.subr.bf16.mxu0 0
    %725 = vmatpush1.bf16.msra.mxu0 %v519
    %726 = vmatprep.subr.bf16.mxu0 0
    %727 = vmatpush1.bf16.msra.mxu0 %v518
    %728 = vmatprep.subr.bf16.mxu0 0
    %729 = vmatpush1.bf16.msra.mxu0 %v517
    %730 = vmatprep.subr.bf16.mxu0 0
    %731 = vmatpush1.bf16.msra.mxu0 %v516
    %732 = vmatprep.subr.bf16.mxu0 0
    %733 = vmatpush2.bf16.msra.mxu0 %v531
    %734 = vmatprep.subr.bf16.mxu0 0
    %735 = vmatpush2.bf16.msra.mxu0 %v530
    %736 = vmatprep.subr.bf16.mxu0 0
    %737 = vmatpush2.bf16.msra.mxu0 %v529
    %738 = vmatprep.subr.bf16.mxu0 0
    %739 = vmatpush2.bf16.msra.mxu0 %v528
    %740 = vmatprep.subr.bf16.mxu0 0
    %741 = vmatpush2.bf16.msra.mxu0 %v527
    %742 = vmatprep.subr.bf16.mxu0 0
    %743 = vmatpush2.bf16.msra.mxu0 %v526
    %744 = vmatprep.subr.bf16.mxu0 0
    %745 = vmatpush2.bf16.msra.mxu0 %v525
    %746 = vmatprep.subr.bf16.mxu0 0
    %747 = vmatpush2.bf16.msra.mxu0 %v524
    %748 = vmatprep.mubr.bf16.mxu0 %v76
    %749 = vmatmul.mubr.bf16.gmra.mxu0 %v75
    %v750 = vpop.f32.mrf.mxu0
    %v751 = vadd.f32 %v711, %v750
    %v752 = vpop.f32.mrf.mxu0
    %v753 = vpop.f32.mrf.mxu0
    %v754 = vpop.f32.mrf.mxu0
    %755 = vdwg.mxu0
    %v756 = vmax.f32 %v751, 0.0
    %v757 = vpack.c.bf16 %v756, %v756
    %v758 = vld [vmem:[%s3] sm:$0xf]
    %v759 = vld [vmem:[%s3 + $0x4] sm:$0xf]
    %v760 = vld [vmem:[%s3 + $0x8] sm:$0xf]
    %v761 = vld [vmem:[%s3 + $0xc] sm:$0xf]
    %v762 = vld [vmem:[%s3 + $0x10] sm:$0xf]
    %v763 = vld [vmem:[%s3 + $0x14] sm:$0xf]
    %v764 = vld [vmem:[%s3 + $0x18] sm:$0xf]
    %v765 = vld [vmem:[%s3 + $0x1c] sm:$0xf]
    %v766 = vld [vmem:[%s3 + $0x20] sm:$0xf]
    %v767 = vld [vmem:[%s3 + $0x24] sm:$0xf]
    %v768 = vld [vmem:[%s3 + $0x28] sm:$0xf]
    %v769 = vld [vmem:[%s3 + $0x2c] sm:$0xf]
    %v770 = vld [vmem:[%s3 + $0x30] sm:$0xf]
    %v771 = vld [vmem:[%s3 + $0x34] sm:$0xf]
    %v772 = vld [vmem:[%s3 + $0x38] sm:$0xf]
    %v773 = vld [vmem:[%s3 + $0x3c] sm:$0xf]
    %v774 = vld [vmem:[%s4] sm:$0x1]
    %v776 = vlaneseq
    %v777 = vshrl.u32 %v776, 7
    %v778 = vsub.s32 0, %v777
    %v779 = vrot.slane %v774, %v778
    %v797 = vunpack.c.l.b16 %v758
    %v798 = vunpack.c.l.b16 %v759
    %v799 = vunpack.c.l.b16 %v760
    %v800 = vunpack.c.l.b16 %v761
    %v801 = vunpack.c.l.b16 %v762
    %v802 = vunpack.c.l.b16 %v763
    %v803 = vunpack.c.l.b16 %v764
    %v804 = vunpack.c.l.b16 %v765
    %v805 = vunpack.c.l.b16 %v766
    %v806 = vunpack.c.l.b16 %v767
    %v807 = vunpack.c.l.b16 %v768
    %v808 = vunpack.c.l.b16 %v769
    %v809 = vunpack.c.l.b16 %v770
    %v810 = vunpack.c.l.b16 %v771
    %v811 = vunpack.c.l.b16 %v772
    %v812 = vunpack.c.l.b16 %v773
    %v813 = vpack.c.b16 %v798, %v797
    %v814 = vpack.c.b16 %v800, %v799
    %v815 = vpack.c.b16 %v802, %v801
    %v816 = vpack.c.b16 %v804, %v803
    %v817 = vpack.c.b16 %v806, %v805
    %v818 = vpack.c.b16 %v808, %v807
    %v819 = vpack.c.b16 %v810, %v809
    %v820 = vpack.c.b16 %v812, %v811
    %829 = vmatprep.subr.bf16.mxu0 0
    %830 = vmatpush1.bf16.msra.mxu0 %v820
    %831 = vmatprep.subr.bf16.mxu0 0
    %832 = vmatpush1.bf16.msra.mxu0 %v819
    %833 = vmatprep.subr.bf16.mxu0 0
    %834 = vmatpush1.bf16.msra.mxu0 %v818
    %835 = vmatprep.subr.bf16.mxu0 0
    %836 = vmatpush1.bf16.msra.mxu0 %v817
    %837 = vmatprep.subr.bf16.mxu0 0
    %838 = vmatpush1.bf16.msra.mxu0 %v816
    %839 = vmatprep.subr.bf16.mxu0 0
    %840 = vmatpush1.bf16.msra.mxu0 %v815
    %841 = vmatprep.subr.bf16.mxu0 0
    %842 = vmatpush1.bf16.msra.mxu0 %v814
    %843 = vmatprep.subr.bf16.mxu0 0
    %844 = vmatpush1.bf16.msra.mxu0 %v813
    %845 = vmatprep.subr.bf16.mxu0 0
    %846 = vmatpush2.bf16.msra.mxu0 0
    %847 = vmatprep.subr.bf16.mxu0 0
    %848 = vmatpush2.bf16.msra.mxu0 0
    %849 = vmatprep.subr.bf16.mxu0 0
    %850 = vmatpush2.bf16.msra.mxu0 0
    %851 = vmatprep.subr.bf16.mxu0 0
    %852 = vmatpush2.bf16.msra.mxu0 0
    %853 = vmatprep.subr.bf16.mxu0 0
    %854 = vmatpush2.bf16.msra.mxu0 0
    %855 = vmatprep.subr.bf16.mxu0 0
    %856 = vmatpush2.bf16.msra.mxu0 0
    %857 = vmatprep.subr.bf16.mxu0 0
    %858 = vmatpush2.bf16.msra.mxu0 0
    %859 = vmatprep.subr.bf16.mxu0 0
    %860 = vmatpush2.bf16.msra.mxu0 0
    %861 = vmatprep.mubr.bf16.mxu0 0
    %862 = vmatmul.mubr.bf16.gmra.mxu0 %v757
    %v863 = vpop.f32.mrf.mxu0
    %v864 = vadd.f32 %v779, %v863
    %v865 = vpop.f32.mrf.mxu0
    %v866 = vpop.f32.mrf.mxu0
    %v867 = vpop.f32.mrf.mxu0
    %868 = vdwg.mxu0
    %v869 = vmax.f32 %v864, 0.0
    %v870 = vpack.c.bf16 %v869, %v869
    %v871 = vld [vmem:[%s5] sm:$0xf]
    %v872 = vld [vmem:[%s5 + $0x4] sm:$0xf]
    %v873 = vld [vmem:[%s5 + $0x8] sm:$0xf]
    %v874 = vld [vmem:[%s5 + $0xc] sm:$0xf]
    %v875 = vld [vmem:[%s5 + $0x10] sm:$0xf]
    %v876 = vld [vmem:[%s5 + $0x14] sm:$0xf]
    %v877 = vld [vmem:[%s5 + $0x18] sm:$0xf]
    %v878 = vld [vmem:[%s5 + $0x1c] sm:$0xf]
    %v879 = vld [vmem:[%s5 + $0x20] sm:$0xf]
    %v880 = vld [vmem:[%s5 + $0x24] sm:$0xf]
    %v881 = vld [vmem:[%s5 + $0x28] sm:$0xf]
    %v882 = vld [vmem:[%s5 + $0x2c] sm:$0xf]
    %v883 = vld [vmem:[%s5 + $0x30] sm:$0xf]
    %v884 = vld [vmem:[%s5 + $0x34] sm:$0xf]
    %v885 = vld [vmem:[%s5 + $0x38] sm:$0xf]
    %v886 = vld [vmem:[%s5 + $0x3c] sm:$0xf]
    %v887 = vld [vmem:[%s6] sm:$0x1]
    %v889 = vlaneseq
    %v890 = vshrl.u32 %v889, 7
    %v891 = vsub.s32 0, %v890
    %v892 = vrot.slane %v887, %v891
    %v910 = vunpack.c.l.b16 %v871
    %v911 = vunpack.c.l.b16 %v872
    %v912 = vunpack.c.l.b16 %v873
    %v913 = vunpack.c.l.b16 %v874
    %v914 = vunpack.c.l.b16 %v875
    %v915 = vunpack.c.l.b16 %v876
    %v916 = vunpack.c.l.b16 %v877
    %v917 = vunpack.c.l.b16 %v878
    %v918 = vunpack.c.l.b16 %v879
    %v919 = vunpack.c.l.b16 %v880
    %v920 = vunpack.c.l.b16 %v881
    %v921 = vunpack.c.l.b16 %v882
    %v922 = vunpack.c.l.b16 %v883
    %v923 = vunpack.c.l.b16 %v884
    %v924 = vunpack.c.l.b16 %v885
    %v925 = vunpack.c.l.b16 %v886
    %v926 = vpack.c.b16 %v911, %v910
    %v927 = vpack.c.b16 %v913, %v912
    %v928 = vpack.c.b16 %v915, %v914
    %v929 = vpack.c.b16 %v917, %v916
    %v930 = vpack.c.b16 %v919, %v918
    %v931 = vpack.c.b16 %v921, %v920
    %v932 = vpack.c.b16 %v923, %v922
    %v933 = vpack.c.b16 %v925, %v924
    %942 = vmatprep.subr.bf16.mxu0 0
    %943 = vmatpush1.bf16.msra.mxu0 %v933
    %944 = vmatprep.subr.bf16.mxu0 0
    %945 = vmatpush1.bf16.msra.mxu0 %v932
    %946 = vmatprep.subr.bf16.mxu0 0
    %947 = vmatpush1.bf16.msra.mxu0 %v931
    %948 = vmatprep.subr.bf16.mxu0 0
    %949 = vmatpush1.bf16.msra.mxu0 %v930
    %950 = vmatprep.subr.bf16.mxu0 0
    %951 = vmatpush1.bf16.msra.mxu0 %v929
    %952 = vmatprep.subr.bf16.mxu0 0
    %953 = vmatpush1.bf16.msra.mxu0 %v928
    %954 = vmatprep.subr.bf16.mxu0 0
    %955 = vmatpush1.bf16.msra.mxu0 %v927
    %956 = vmatprep.subr.bf16.mxu0 0
    %957 = vmatpush1.bf16.msra.mxu0 %v926
    %958 = vmatprep.subr.bf16.mxu0 0
    %959 = vmatpush2.bf16.msra.mxu0 0
    %960 = vmatprep.subr.bf16.mxu0 0
    %961 = vmatpush2.bf16.msra.mxu0 0
    %962 = vmatprep.subr.bf16.mxu0 0
    %963 = vmatpush2.bf16.msra.mxu0 0
    %964 = vmatprep.subr.bf16.mxu0 0
    %965 = vmatpush2.bf16.msra.mxu0 0
    %966 = vmatprep.subr.bf16.mxu0 0
    %967 = vmatpush2.bf16.msra.mxu0 0
    %968 = vmatprep.subr.bf16.mxu0 0
    %969 = vmatpush2.bf16.msra.mxu0 0
    %970 = vmatprep.subr.bf16.mxu0 0
    %971 = vmatpush2.bf16.msra.mxu0 0
    %972 = vmatprep.subr.bf16.mxu0 0
    %973 = vmatpush2.bf16.msra.mxu0 0
    %974 = vmatprep.mubr.bf16.mxu0 0
    %975 = vmatmul.mubr.bf16.gmra.mxu0 %v870
    %v976 = vpop.f32.mrf.mxu0
    %v977 = vadd.f32 %v892, %v976
    %v978 = vpop.f32.mrf.mxu0
    %v979 = vpop.f32.mrf.mxu0
    %v980 = vpop.f32.mrf.mxu0
    %981 = vdwg.mxu0
    %v982 = vmax.f32 %v977, 0.0
    %v983 = vpack.c.bf16 %v982, %v982
    %v984 = vld [vmem:[#allocation4] sm:$0xff]
    %v985 = vld [vmem:[#allocation4 + $0x8] sm:$0xff]
    %v986 = vld [vmem:[#allocation4 + $0x10] sm:$0xff]
    %v987 = vld [vmem:[#allocation4 + $0x18] sm:$0xff]
    %v988 = vld [vmem:[#allocation4 + $0x20] sm:$0xff]
    %v989 = vld [vmem:[#allocation4 + $0x28] sm:$0xff]
    %v990 = vld [vmem:[#allocation4 + $0x30] sm:$0xff]
    %v991 = vld [vmem:[#allocation4 + $0x38] sm:$0xff]
    %v992 = vld [vmem:[#allocation4 + $0x40] sm:$0xff]
    %v993 = vld [vmem:[#allocation4 + $0x48] sm:$0xff]
    %v994 = vld [vmem:[#allocation4 + $0x50] sm:$0xff]
    %v995 = vld [vmem:[#allocation4 + $0x58] sm:$0xff]
    %v996 = vld [vmem:[#allocation4 + $0x60] sm:$0xff]
    %v997 = vld [vmem:[#allocation4 + $0x68] sm:$0xff]
    %v998 = vld [vmem:[#allocation4 + $0x70] sm:$0xff]
    %v999 = vld [vmem:[#allocation4 + $0x78] sm:$0xff]
    %v1000 = vld [vmem:[#allocation4 + $0x80] sm:$0xff]
    %v1001 = vld [vmem:[#allocation4 + $0x88] sm:$0xff]
    %v1002 = vld [vmem:[#allocation4 + $0x90] sm:$0xff]
    %v1003 = vld [vmem:[#allocation4 + $0x98] sm:$0xff]
    %v1004 = vld [vmem:[#allocation4 + $0xa0] sm:$0xff]
    %v1005 = vld [vmem:[#allocation4 + $0xa8] sm:$0xff]
    %v1006 = vld [vmem:[#allocation4 + $0xb0] sm:$0xff]
    %v1007 = vld [vmem:[#allocation4 + $0xb8] sm:$0xff]
    %v1008 = vld [vmem:[#allocation4 + $0xc0] sm:$0xff]
    %v1009 = vld [vmem:[#allocation4 + $0xc8] sm:$0xff]
    %v1010 = vld [vmem:[#allocation4 + $0xd0] sm:$0xff]
    %v1011 = vld [vmem:[#allocation4 + $0xd8] sm:$0xff]
    %v1012 = vld [vmem:[#allocation4 + $0xe0] sm:$0xff]
    %v1013 = vld [vmem:[#allocation4 + $0xe8] sm:$0xff]
    %v1014 = vld [vmem:[#allocation4 + $0xf0] sm:$0xff]
    %v1015 = vld [vmem:[#allocation4 + $0xf8] sm:$0xff]
    %v1016 = vld [vmem:[#allocation4 + $0x100] sm:$0xff]
    %v1017 = vld [vmem:[#allocation4 + $0x108] sm:$0xff]
    %v1018 = vld [vmem:[#allocation4 + $0x110] sm:$0xff]
    %v1019 = vld [vmem:[#allocation4 + $0x118] sm:$0xff]
    %v1020 = vld [vmem:[#allocation4 + $0x120] sm:$0xff]
    %v1021 = vld [vmem:[#allocation4 + $0x128] sm:$0xff]
    %v1022 = vld [vmem:[#allocation4 + $0x130] sm:$0xff]
    %v1023 = vld [vmem:[#allocation4 + $0x138] sm:$0xff]
    %v1024 = vld [vmem:[#allocation4 + $0x140] sm:$0xff]
    %v1025 = vld [vmem:[#allocation4 + $0x148] sm:$0xff]
    %v1026 = vld [vmem:[#allocation4 + $0x150] sm:$0xff]
    %v1027 = vld [vmem:[#allocation4 + $0x158] sm:$0xff]
    %v1028 = vld [vmem:[#allocation4 + $0x160] sm:$0xff]
    %v1029 = vld [vmem:[#allocation4 + $0x168] sm:$0xff]
    %v1030 = vld [vmem:[#allocation4 + $0x170] sm:$0xff]
    %v1031 = vld [vmem:[#allocation4 + $0x178] sm:$0xff]
    %v1032 = vld [vmem:[#allocation4 + $0x180] sm:$0xff]
    %v1033 = vld [vmem:[#allocation4 + $0x188] sm:$0xff]
    %v1034 = vld [vmem:[#allocation4 + $0x190] sm:$0xff]
    %v1035 = vld [vmem:[#allocation4 + $0x198] sm:$0xff]
    %v1036 = vld [vmem:[#allocation4 + $0x1a0] sm:$0xff]
    %v1037 = vld [vmem:[#allocation4 + $0x1a8] sm:$0xff]
    %v1038 = vld [vmem:[#allocation4 + $0x1b0] sm:$0xff]
    %v1039 = vld [vmem:[#allocation4 + $0x1b8] sm:$0xff]
    %v1040 = vld [vmem:[#allocation4 + $0x1c0] sm:$0xff]
    %v1041 = vld [vmem:[#allocation4 + $0x1c8] sm:$0xff]
    %v1042 = vld [vmem:[#allocation4 + $0x1d0] sm:$0xff]
    %v1043 = vld [vmem:[#allocation4 + $0x1d8] sm:$0xff]
    %v1044 = vld [vmem:[#allocation4 + $0x1e0] sm:$0xff]
    %v1045 = vld [vmem:[#allocation4 + $0x1e8] sm:$0xff]
    %v1046 = vld [vmem:[#allocation4 + $0x1f0] sm:$0xff]
    %v1047 = vld [vmem:[#allocation4 + $0x1f8] sm:$0xff]
    %v1048 = vld [vmem:[%s8] sm:$0xff]
    %v1050 = vlaneseq
    %v1051 = vshrl.u32 %v1050, 7
    %v1052 = vsub.s32 0, %v1051
    %v1053 = vrot.slane %v1048, %v1052
    %v1054 = vlaneseq
    %v1055 = vshrl.u32 %v1054, 7
    %v1056 = vsub.s32 1, %v1055
    %v1057 = vrot.slane %v1048, %v1056
    %v1058 = vlaneseq
    %v1059 = vshrl.u32 %v1058, 7
    %v1060 = vsub.s32 2, %v1059
    %v1061 = vrot.slane %v1048, %v1060
    %v1062 = vlaneseq
    %v1063 = vshrl.u32 %v1062, 7
    %v1064 = vsub.s32 3, %v1063
    %v1065 = vrot.slane %v1048, %v1064
    %v1066 = vlaneseq
    %v1067 = vshrl.u32 %v1066, 7
    %v1068 = vsub.s32 4, %v1067
    %v1069 = vrot.slane %v1048, %v1068
    %v1070 = vlaneseq
    %v1071 = vshrl.u32 %v1070, 7
    %v1072 = vsub.s32 5, %v1071
    %v1073 = vrot.slane %v1048, %v1072
    %v1074 = vlaneseq
    %v1075 = vshrl.u32 %v1074, 7
    %v1076 = vsub.s32 6, %v1075
    %v1077 = vrot.slane %v1048, %v1076
    %v1078 = vlaneseq
    %v1079 = vshrl.u32 %v1078, 7
    %v1080 = vsub.s32 7, %v1079
    %v1081 = vrot.slane %v1048, %v1080
    %v1154 = vunpack.c.l.b16 %v984
    %v1155 = vunpack.c.h.b16 %v984
    %v1156 = vunpack.c.l.b16 %v985
    %v1157 = vunpack.c.h.b16 %v985
    %v1158 = vunpack.c.l.b16 %v986
    %v1159 = vunpack.c.h.b16 %v986
    %v1160 = vunpack.c.l.b16 %v987
    %v1161 = vunpack.c.h.b16 %v987
    %v1162 = vunpack.c.l.b16 %v988
    %v1163 = vunpack.c.h.b16 %v988
    %v1164 = vunpack.c.l.b16 %v989
    %v1165 = vunpack.c.h.b16 %v989
    %v1166 = vunpack.c.l.b16 %v990
    %v1167 = vunpack.c.h.b16 %v990
    %v1168 = vunpack.c.l.b16 %v991
    %v1169 = vunpack.c.h.b16 %v991
    %v1170 = vunpack.c.l.b16 %v992
    %v1171 = vunpack.c.h.b16 %v992
    %v1172 = vunpack.c.l.b16 %v993
    %v1173 = vunpack.c.h.b16 %v993
    %v1174 = vunpack.c.l.b16 %v994
    %v1175 = vunpack.c.h.b16 %v994
    %v1176 = vunpack.c.l.b16 %v995
    %v1177 = vunpack.c.h.b16 %v995
    %v1178 = vunpack.c.l.b16 %v996
    %v1179 = vunpack.c.h.b16 %v996
    %v1180 = vunpack.c.l.b16 %v997
    %v1181 = vunpack.c.h.b16 %v997
    %v1182 = vunpack.c.l.b16 %v998
    %v1183 = vunpack.c.h.b16 %v998
    %v1184 = vunpack.c.l.b16 %v999
    %v1185 = vunpack.c.h.b16 %v999
    %v1186 = vunpack.c.l.b16 %v1000
    %v1187 = vunpack.c.h.b16 %v1000
    %v1188 = vunpack.c.l.b16 %v1001
    %v1189 = vunpack.c.h.b16 %v1001
    %v1190 = vunpack.c.l.b16 %v1002
    %v1191 = vunpack.c.h.b16 %v1002
    %v1192 = vunpack.c.l.b16 %v1003
    %v1193 = vunpack.c.h.b16 %v1003
    %v1194 = vunpack.c.l.b16 %v1004
    %v1195 = vunpack.c.h.b16 %v1004
    %v1196 = vunpack.c.l.b16 %v1005
    %v1197 = vunpack.c.h.b16 %v1005
    %v1198 = vunpack.c.l.b16 %v1006
    %v1199 = vunpack.c.h.b16 %v1006
    %v1200 = vunpack.c.l.b16 %v1007
    %v1201 = vunpack.c.h.b16 %v1007
    %v1202 = vunpack.c.l.b16 %v1008
    %v1203 = vunpack.c.h.b16 %v1008
    %v1204 = vunpack.c.l.b16 %v1009
    %v1205 = vunpack.c.h.b16 %v1009
    %v1206 = vunpack.c.l.b16 %v1010
    %v1207 = vunpack.c.h.b16 %v1010
    %v1208 = vunpack.c.l.b16 %v1011
    %v1209 = vunpack.c.h.b16 %v1011
    %v1210 = vunpack.c.l.b16 %v1012
    %v1211 = vunpack.c.h.b16 %v1012
    %v1212 = vunpack.c.l.b16 %v1013
    %v1213 = vunpack.c.h.b16 %v1013
    %v1214 = vunpack.c.l.b16 %v1014
    %v1215 = vunpack.c.h.b16 %v1014
    %v1216 = vunpack.c.l.b16 %v1015
    %v1217 = vunpack.c.h.b16 %v1015
    %v1218 = vunpack.c.l.b16 %v1016
    %v1219 = vunpack.c.h.b16 %v1016
    %v1220 = vunpack.c.l.b16 %v1017
    %v1221 = vunpack.c.h.b16 %v1017
    %v1222 = vunpack.c.l.b16 %v1018
    %v1223 = vunpack.c.h.b16 %v1018
    %v1224 = vunpack.c.l.b16 %v1019
    %v1225 = vunpack.c.h.b16 %v1019
    %v1226 = vunpack.c.l.b16 %v1020
    %v1227 = vunpack.c.h.b16 %v1020
    %v1228 = vunpack.c.l.b16 %v1021
    %v1229 = vunpack.c.h.b16 %v1021
    %v1230 = vunpack.c.l.b16 %v1022
    %v1231 = vunpack.c.h.b16 %v1022
    %v1232 = vunpack.c.l.b16 %v1023
    %v1233 = vunpack.c.h.b16 %v1023
    %v1234 = vunpack.c.l.b16 %v1024
    %v1235 = vunpack.c.h.b16 %v1024
    %v1236 = vunpack.c.l.b16 %v1025
    %v1237 = vunpack.c.h.b16 %v1025
    %v1238 = vunpack.c.l.b16 %v1026
    %v1239 = vunpack.c.h.b16 %v1026
    %v1240 = vunpack.c.l.b16 %v1027
    %v1241 = vunpack.c.h.b16 %v1027
    %v1242 = vunpack.c.l.b16 %v1028
    %v1243 = vunpack.c.h.b16 %v1028
    %v1244 = vunpack.c.l.b16 %v1029
    %v1245 = vunpack.c.h.b16 %v1029
    %v1246 = vunpack.c.l.b16 %v1030
    %v1247 = vunpack.c.h.b16 %v1030
    %v1248 = vunpack.c.l.b16 %v1031
    %v1249 = vunpack.c.h.b16 %v1031
    %v1250 = vunpack.c.l.b16 %v1032
    %v1251 = vunpack.c.h.b16 %v1032
    %v1252 = vunpack.c.l.b16 %v1033
    %v1253 = vunpack.c.h.b16 %v1033
    %v1254 = vunpack.c.l.b16 %v1034
    %v1255 = vunpack.c.h.b16 %v1034
    %v1256 = vunpack.c.l.b16 %v1035
    %v1257 = vunpack.c.h.b16 %v1035
    %v1258 = vunpack.c.l.b16 %v1036
    %v1259 = vunpack.c.h.b16 %v1036
    %v1260 = vunpack.c.l.b16 %v1037
    %v1261 = vunpack.c.h.b16 %v1037
    %v1262 = vunpack.c.l.b16 %v1038
    %v1263 = vunpack.c.h.b16 %v1038
    %v1264 = vunpack.c.l.b16 %v1039
    %v1265 = vunpack.c.h.b16 %v1039
    %v1266 = vunpack.c.l.b16 %v1040
    %v1267 = vunpack.c.h.b16 %v1040
    %v1268 = vunpack.c.l.b16 %v1041
    %v1269 = vunpack.c.h.b16 %v1041
    %v1270 = vunpack.c.l.b16 %v1042
    %v1271 = vunpack.c.h.b16 %v1042
    %v1272 = vunpack.c.l.b16 %v1043
    %v1273 = vunpack.c.h.b16 %v1043
    %v1274 = vunpack.c.l.b16 %v1044
    %v1275 = vunpack.c.h.b16 %v1044
    %v1276 = vunpack.c.l.b16 %v1045
    %v1277 = vunpack.c.h.b16 %v1045
    %v1278 = vunpack.c.l.b16 %v1046
    %v1279 = vunpack.c.h.b16 %v1046
    %v1280 = vunpack.c.l.b16 %v1047
    %v1281 = vunpack.c.h.b16 %v1047
    %v1282 = vpack.c.b16 %v1162, %v1154
    %v1283 = vpack.c.b16 %v1163, %v1155
    %v1284 = vpack.c.b16 %v1164, %v1156
    %v1285 = vpack.c.b16 %v1165, %v1157
    %v1286 = vpack.c.b16 %v1166, %v1158
    %v1287 = vpack.c.b16 %v1167, %v1159
    %v1288 = vpack.c.b16 %v1168, %v1160
    %v1289 = vpack.c.b16 %v1169, %v1161
    %v1290 = vpack.c.b16 %v1178, %v1170
    %v1291 = vpack.c.b16 %v1179, %v1171
    %v1292 = vpack.c.b16 %v1180, %v1172
    %v1293 = vpack.c.b16 %v1181, %v1173
    %v1294 = vpack.c.b16 %v1182, %v1174
    %v1295 = vpack.c.b16 %v1183, %v1175
    %v1296 = vpack.c.b16 %v1184, %v1176
    %v1297 = vpack.c.b16 %v1185, %v1177
    %v1298 = vpack.c.b16 %v1194, %v1186
    %v1299 = vpack.c.b16 %v1195, %v1187
    %v1300 = vpack.c.b16 %v1196, %v1188
    %v1301 = vpack.c.b16 %v1197, %v1189
    %v1302 = vpack.c.b16 %v1198, %v1190
    %v1303 = vpack.c.b16 %v1199, %v1191
    %v1304 = vpack.c.b16 %v1200, %v1192
    %v1305 = vpack.c.b16 %v1201, %v1193
    %v1306 = vpack.c.b16 %v1210, %v1202
    %v1307 = vpack.c.b16 %v1211, %v1203
    %v1308 = vpack.c.b16 %v1212, %v1204
    %v1309 = vpack.c.b16 %v1213, %v1205
    %v1310 = vpack.c.b16 %v1214, %v1206
    %v1311 = vpack.c.b16 %v1215, %v1207
    %v1312 = vpack.c.b16 %v1216, %v1208
    %v1313 = vpack.c.b16 %v1217, %v1209
    %v1314 = vpack.c.b16 %v1226, %v1218
    %v1315 = vpack.c.b16 %v1227, %v1219
    %v1316 = vpack.c.b16 %v1228, %v1220
    %v1317 = vpack.c.b16 %v1229, %v1221
    %v1318 = vpack.c.b16 %v1230, %v1222
    %v1319 = vpack.c.b16 %v1231, %v1223
    %v1320 = vpack.c.b16 %v1232, %v1224
    %v1321 = vpack.c.b16 %v1233, %v1225
    %v1322 = vpack.c.b16 %v1242, %v1234
    %v1323 = vpack.c.b16 %v1243, %v1235
    %v1324 = vpack.c.b16 %v1244, %v1236
    %v1325 = vpack.c.b16 %v1245, %v1237
    %v1326 = vpack.c.b16 %v1246, %v1238
    %v1327 = vpack.c.b16 %v1247, %v1239
    %v1328 = vpack.c.b16 %v1248, %v1240
    %v1329 = vpack.c.b16 %v1249, %v1241
    %v1330 = vpack.c.b16 %v1258, %v1250
    %v1331 = vpack.c.b16 %v1259, %v1251
    %v1332 = vpack.c.b16 %v1260, %v1252
    %v1333 = vpack.c.b16 %v1261, %v1253
    %v1334 = vpack.c.b16 %v1262, %v1254
    %v1335 = vpack.c.b16 %v1263, %v1255
    %v1336 = vpack.c.b16 %v1264, %v1256
    %v1337 = vpack.c.b16 %v1265, %v1257
    %v1338 = vpack.c.b16 %v1274, %v1266
    %v1339 = vpack.c.b16 %v1275, %v1267
    %v1340 = vpack.c.b16 %v1276, %v1268
    %v1341 = vpack.c.b16 %v1277, %v1269
    %v1342 = vpack.c.b16 %v1278, %v1270
    %v1343 = vpack.c.b16 %v1279, %v1271
    %v1344 = vpack.c.b16 %v1280, %v1272
    %v1345 = vpack.c.b16 %v1281, %v1273
    %1410 = vmatprep.subr.bf16.mxu0 %v1339
    %1411 = vmatpush1.bf16.msra.mxu0 %v1338
    %1412 = vmatprep.subr.bf16.mxu0 %v1331
    %1413 = vmatpush1.bf16.msra.mxu0 %v1330
    %1414 = vmatprep.subr.bf16.mxu0 %v1323
    %1415 = vmatpush1.bf16.msra.mxu0 %v1322
    %1416 = vmatprep.subr.bf16.mxu0 %v1315
    %1417 = vmatpush1.bf16.msra.mxu0 %v1314
    %1418 = vmatprep.subr.bf16.mxu0 %v1307
    %1419 = vmatpush1.bf16.msra.mxu0 %v1306
    %1420 = vmatprep.subr.bf16.mxu0 %v1299
    %1421 = vmatpush1.bf16.msra.mxu0 %v1298
    %1422 = vmatprep.subr.bf16.mxu0 %v1291
    %1423 = vmatpush1.bf16.msra.mxu0 %v1290
    %1424 = vmatprep.subr.bf16.mxu0 %v1283
    %1425 = vmatpush1.bf16.msra.mxu0 %v1282
    %1426 = vmatprep.subr.bf16.mxu0 0
    %1427 = vmatpush2.bf16.msra.mxu0 0
    %1428 = vmatprep.subr.bf16.mxu0 0
    %1429 = vmatpush2.bf16.msra.mxu0 0
    %1430 = vmatprep.subr.bf16.mxu0 0
    %1431 = vmatpush2.bf16.msra.mxu0 0
    %1432 = vmatprep.subr.bf16.mxu0 0
    %1433 = vmatpush2.bf16.msra.mxu0 0
    %1434 = vmatprep.subr.bf16.mxu0 0
    %1435 = vmatpush2.bf16.msra.mxu0 0
    %1436 = vmatprep.subr.bf16.mxu0 0
    %1437 = vmatpush2.bf16.msra.mxu0 0
    %1438 = vmatprep.subr.bf16.mxu0 0
    %1439 = vmatpush2.bf16.msra.mxu0 0
    %1440 = vmatprep.subr.bf16.mxu0 0
    %1441 = vmatpush2.bf16.msra.mxu0 0
    %1442 = vmatprep.mubr.bf16.mxu0 0
    %1443 = vmatmul.mubr.bf16.gmra.mxu0 %v983
    %v1444 = vpop.f32.mrf.mxu0
    %v1445 = vadd.f32 %v1053, %v1444
    %v1446 = vpop.f32.mrf.mxu0
    %v1447 = vadd.f32 %v1057, %v1446
    %v1448 = vpop.f32.mrf.mxu0
    %v1449 = vpop.f32.mrf.mxu0
    %1450 = vdwg.mxu0
    %1451 = vmatprep.subr.bf16.mxu0 %v1341
    %1452 = vmatpush1.bf16.msra.mxu0 %v1340
    %1453 = vmatprep.subr.bf16.mxu0 %v1333
    %1454 = vmatpush1.bf16.msra.mxu0 %v1332
    %1455 = vmatprep.subr.bf16.mxu0 %v1325
    %1456 = vmatpush1.bf16.msra.mxu0 %v1324
    %1457 = vmatprep.subr.bf16.mxu0 %v1317
    %1458 = vmatpush1.bf16.msra.mxu0 %v1316
    %1459 = vmatprep.subr.bf16.mxu0 %v1309
    %1460 = vmatpush1.bf16.msra.mxu0 %v1308
    %1461 = vmatprep.subr.bf16.mxu0 %v1301
    %1462 = vmatpush1.bf16.msra.mxu0 %v1300
    %1463 = vmatprep.subr.bf16.mxu0 %v1293
    %1464 = vmatpush1.bf16.msra.mxu0 %v1292
    %1465 = vmatprep.subr.bf16.mxu0 %v1285
    %1466 = vmatpush1.bf16.msra.mxu0 %v1284
    %1467 = vmatprep.subr.bf16.mxu0 0
    %1468 = vmatpush2.bf16.msra.mxu0 0
    %1469 = vmatprep.subr.bf16.mxu0 0
    %1470 = vmatpush2.bf16.msra.mxu0 0
    %1471 = vmatprep.subr.bf16.mxu0 0
    %1472 = vmatpush2.bf16.msra.mxu0 0
    %1473 = vmatprep.subr.bf16.mxu0 0
    %1474 = vmatpush2.bf16.msra.mxu0 0
    %1475 = vmatprep.subr.bf16.mxu0 0
    %1476 = vmatpush2.bf16.msra.mxu0 0
    %1477 = vmatprep.subr.bf16.mxu0 0
    %1478 = vmatpush2.bf16.msra.mxu0 0
    %1479 = vmatprep.subr.bf16.mxu0 0
    %1480 = vmatpush2.bf16.msra.mxu0 0
    %1481 = vmatprep.subr.bf16.mxu0 0
    %1482 = vmatpush2.bf16.msra.mxu0 0
    %1483 = vmatprep.mubr.bf16.mxu0 0
    %1484 = vmatmul.mubr.bf16.gmra.mxu0 %v983
    %v1485 = vpop.f32.mrf.mxu0
    %v1486 = vadd.f32 %v1061, %v1485
    %v1487 = vpop.f32.mrf.mxu0
    %v1488 = vadd.f32 %v1065, %v1487
    %v1489 = vpop.f32.mrf.mxu0
    %v1490 = vpop.f32.mrf.mxu0
    %1491 = vdwg.mxu0
    %1492 = vmatprep.subr.bf16.mxu0 %v1343
    %1493 = vmatpush1.bf16.msra.mxu0 %v1342
    %1494 = vmatprep.subr.bf16.mxu0 %v1335
    %1495 = vmatpush1.bf16.msra.mxu0 %v1334
    %1496 = vmatprep.subr.bf16.mxu0 %v1327
    %1497 = vmatpush1.bf16.msra.mxu0 %v1326
    %1498 = vmatprep.subr.bf16.mxu0 %v1319
    %1499 = vmatpush1.bf16.msra.mxu0 %v1318
    %1500 = vmatprep.subr.bf16.mxu0 %v1311
    %1501 = vmatpush1.bf16.msra.mxu0 %v1310
    %1502 = vmatprep.subr.bf16.mxu0 %v1303
    %1503 = vmatpush1.bf16.msra.mxu0 %v1302
    %1504 = vmatprep.subr.bf16.mxu0 %v1295
    %1505 = vmatpush1.bf16.msra.mxu0 %v1294
    %1506 = vmatprep.subr.bf16.mxu0 %v1287
    %1507 = vmatpush1.bf16.msra.mxu0 %v1286
    %1508 = vmatprep.subr.bf16.mxu0 0
    %1509 = vmatpush2.bf16.msra.mxu0 0
    %1510 = vmatprep.subr.bf16.mxu0 0
    %1511 = vmatpush2.bf16.msra.mxu0 0
    %1512 = vmatprep.subr.bf16.mxu0 0
    %1513 = vmatpush2.bf16.msra.mxu0 0
    %1514 = vmatprep.subr.bf16.mxu0 0
    %1515 = vmatpush2.bf16.msra.mxu0 0
    %1516 = vmatprep.subr.bf16.mxu0 0
    %1517 = vmatpush2.bf16.msra.mxu0 0
    %1518 = vmatprep.subr.bf16.mxu0 0
    %1519 = vmatpush2.bf16.msra.mxu0 0
    %1520 = vmatprep.subr.bf16.mxu0 0
    %1521 = vmatpush2.bf16.msra.mxu0 0
    %1522 = vmatprep.subr.bf16.mxu0 0
    %1523 = vmatpush2.bf16.msra.mxu0 0
    %1524 = vmatprep.mubr.bf16.mxu0 0
    %1525 = vmatmul.mubr.bf16.gmra.mxu0 %v983
    %v1526 = vpop.f32.mrf.mxu0
    %v1527 = vadd.f32 %v1069, %v1526
    %v1528 = vpop.f32.mrf.mxu0
    %v1529 = vadd.f32 %v1073, %v1528
    %v1530 = vpop.f32.mrf.mxu0
    %v1531 = vpop.f32.mrf.mxu0
    %1532 = vdwg.mxu0
    %1533 = vmatprep.subr.bf16.mxu0 %v1345
    %1534 = vmatpush1.bf16.msra.mxu0 %v1344
    %1535 = vmatprep.subr.bf16.mxu0 %v1337
    %1536 = vmatpush1.bf16.msra.mxu0 %v1336
    %1537 = vmatprep.subr.bf16.mxu0 %v1329
    %1538 = vmatpush1.bf16.msra.mxu0 %v1328
    %1539 = vmatprep.subr.bf16.mxu0 %v1321
    %1540 = vmatpush1.bf16.msra.mxu0 %v1320
    %1541 = vmatprep.subr.bf16.mxu0 %v1313
    %1542 = vmatpush1.bf16.msra.mxu0 %v1312
    %1543 = vmatprep.subr.bf16.mxu0 %v1305
    %1544 = vmatpush1.bf16.msra.mxu0 %v1304
    %1545 = vmatprep.subr.bf16.mxu0 %v1297
    %1546 = vmatpush1.bf16.msra.mxu0 %v1296
    %1547 = vmatprep.subr.bf16.mxu0 %v1289
    %1548 = vmatpush1.bf16.msra.mxu0 %v1288
    %1549 = vmatprep.subr.bf16.mxu0 0
    %1550 = vmatpush2.bf16.msra.mxu0 0
    %1551 = vmatprep.subr.bf16.mxu0 0
    %1552 = vmatpush2.bf16.msra.mxu0 0
    %1553 = vmatprep.subr.bf16.mxu0 0
    %1554 = vmatpush2.bf16.msra.mxu0 0
    %1555 = vmatprep.subr.bf16.mxu0 0
    %1556 = vmatpush2.bf16.msra.mxu0 0
    %1557 = vmatprep.subr.bf16.mxu0 0
    %1558 = vmatpush2.bf16.msra.mxu0 0
    %1559 = vmatprep.subr.bf16.mxu0 0
    %1560 = vmatpush2.bf16.msra.mxu0 0
    %1561 = vmatprep.subr.bf16.mxu0 0
    %1562 = vmatpush2.bf16.msra.mxu0 0
    %1563 = vmatprep.subr.bf16.mxu0 0
    %1564 = vmatpush2.bf16.msra.mxu0 0
    %1565 = vmatprep.mubr.bf16.mxu0 0
    %1566 = vmatmul.mubr.bf16.gmra.mxu0 %v983
    %v1567 = vpop.f32.mrf.mxu0
    %v1568 = vadd.f32 %v1077, %v1567
    %v1569 = vpop.f32.mrf.mxu0
    %v1570 = vadd.f32 %v1081, %v1569
    %v1571 = vpop.f32.mrf.mxu0
    %v1572 = vpop.f32.mrf.mxu0
    %1573 = vdwg.mxu0
    %v1574 = vxor.u32 %v1445, 2147483648
    %v1575 = vxor.u32 %v1447, 2147483648
    %v1576 = vxor.u32 %v1486, 2147483648
    %v1577 = vxor.u32 %v1488, 2147483648
    %v1578 = vxor.u32 %v1527, 2147483648
    %v1579 = vxor.u32 %v1529, 2147483648
    %v1580 = vxor.u32 %v1568, 2147483648
    %v1581 = vxor.u32 %v1570, 2147483648
    %v1582 = vmul.f32 %v1574, 1.442695
    %v1583 = vpow.pop %v1582
    %v1584 = vmul.f32 %v1575, 1.442695
    %v1585 = vpow.pop %v1584
    %v1586 = vmul.f32 %v1576, 1.442695
    %v1587 = vpow.pop %v1586
    %v1588 = vmul.f32 %v1577, 1.442695
    %v1589 = vpow.pop %v1588
    %v1590 = vmul.f32 %v1578, 1.442695
    %v1591 = vpow.pop %v1590
    %v1592 = vmul.f32 %v1579, 1.442695
    %v1593 = vpow.pop %v1592
    %v1594 = vmul.f32 %v1580, 1.442695
    %v1595 = vpow.pop %v1594
    %v1596 = vmul.f32 %v1581, 1.442695
    %v1597 = vpow.pop %v1596
    %v1598 = vadd.f32 %v1583, 1.0
    %v1599 = vadd.f32 %v1585, 1.0
    %v1600 = vadd.f32 %v1587, 1.0
    %v1601 = vadd.f32 %v1589, 1.0
    %v1602 = vadd.f32 %v1591, 1.0
    %v1603 = vadd.f32 %v1593, 1.0
    %v1604 = vadd.f32 %v1595, 1.0
    %v1605 = vadd.f32 %v1597, 1.0
    %v1606 = vrcp.pop %v1598
    %v1607 = vmul.f32 1.0, %v1606
    %v1608 = vrcp.pop %v1599
    %v1609 = vmul.f32 1.0, %v1608
    %v1610 = vrcp.pop %v1600
    %v1611 = vmul.f32 1.0, %v1610
    %v1612 = vrcp.pop %v1601
    %v1613 = vmul.f32 1.0, %v1612
    %v1614 = vrcp.pop %v1602
    %v1615 = vmul.f32 1.0, %v1614
    %v1616 = vrcp.pop %v1603
    %v1617 = vmul.f32 1.0, %v1616
    %v1618 = vrcp.pop %v1604
    %v1619 = vmul.f32 1.0, %v1618
    %v1620 = vrcp.pop %v1605
    %v1621 = vmul.f32 1.0, %v1620
    %v1622 = vadd.f32 %v1607, %v1609
    %v1623 = vadd.f32 %v1622, %v1611
    %v1624 = vadd.f32 %v1623, %v1613
    %1625 = vadd.xlane.f32.xlu0 %v1624
    %v1626 = vpop.xlane.xlu0 %1625
    %v1627 = vrcp.pop 512.0
    %v1628 = vmul.f32 %v1626, %v1627
    %vm1629 = vcmp.ge.f32.partialorder %v1607, %v1628
    %vm1630 = vcmp.ge.f32.partialorder %v1609, %v1628
    %vm1631 = vcmp.ge.f32.partialorder %v1611, %v1628
    %vm1632 = vcmp.ge.f32.partialorder %v1613, %v1628
    %v1633 = vsel %vm1629, 1.0, 0.0
    %v1634 = vsel %vm1630, 1.0, 0.0
    %v1635 = vsel %vm1631, 1.0, 0.0
    %v1636 = vsel %vm1632, 1.0, 0.0
    %1637 = vst [vmem:[%s9] sm:$0xff] %v1633
    %1638 = vst [vmem:[%s9 + $0x8] sm:$0xff] %v1634
    %1639 = vst [vmem:[%s9 + $0x10] sm:$0xff] %v1635
    %1640 = vst [vmem:[%s9 + $0x18] sm:$0xff] %v1636
    %v1641 = vadd.f32 %v1615, %v1617
    %v1642 = vadd.f32 %v1641, %v1619
    %v1643 = vadd.f32 %v1642, %v1621
    %1644 = vadd.xlane.f32.xlu0 %v1643
    %v1645 = vpop.xlane.xlu0 %1644
    %v1646 = vmul.f32 %v1645, %v1627
    %vm1647 = vcmp.ge.f32.partialorder %v1615, %v1646
    %vm1648 = vcmp.ge.f32.partialorder %v1617, %v1646
    %vm1649 = vcmp.ge.f32.partialorder %v1619, %v1646
    %vm1650 = vcmp.ge.f32.partialorder %v1621, %v1646
    %v1651 = vsel %vm1647, 1.0, 0.0
    %v1652 = vsel %vm1648, 1.0, 0.0
    %v1653 = vsel %vm1649, 1.0, 0.0
    %v1654 = vsel %vm1650, 1.0, 0.0
    %1655 = vst [vmem:[%s9 + $0x20] sm:$0xff] %v1651
    %1656 = vst [vmem:[%s9 + $0x28] sm:$0xff] %v1652
    %1657 = vst [vmem:[%s9 + $0x30] sm:$0xff] %v1653
    %1658 = vst [vmem:[%s9 + $0x38] sm:$0xff] %v1654
    // Predicated region
    $region46: #{autoencoder_forward.1} parent=1 // pred_check
      _
    $region47: #{autoencoder_forward.1} parent=1 // pred_check_branch
      %1660 = sbr.rel (0) target = $region49
    $region48: #{autoencoder_forward.1} parent=1 // pred_region
      _
    $region49: #{autoencoder_forward.1} parent=1 // pred_fallthru
      _
    // Predicated region
    $region50: #{autoencoder_forward.1} parent=1 // pred_check
      _
    $region51: #{autoencoder_forward.1} parent=1 // pred_check_branch
      %1662 = sbr.rel (0) target = $region53
    $region52: #{autoencoder_forward.1} parent=1 // pred_region
      _
    $region53: #{autoencoder_forward.1} parent=1 // pred_fallthru
      _
    %1663 = vsyncpa [#allocation3], 1
    %1664 = vsyncpa [#allocation5], 1

</llo_original>
